<compile_context>
chip_gen: v7x
topology: tpu7x:2x2x1
jax: 0.10.0
libtpu: 0.0.40
codegen_flags: <defaults>
</compile_context>

<pallas_src>
import jax
import jax.numpy as jnp
from jax.experimental import pallas as pl
from jax.experimental.pallas import tpu as pltpu


def sagenet_kernel(adj_ref, h_ref, out_ref):
    """adj_ref: (G, N, N) bf16 (adj[g, v, u] = edge u->v), h_ref: (G, N, D) f32,
    out_ref: (N, G*D) f32 lane-dense slab (graph g occupies lanes [g*D, (g+1)*D))."""
    G, N, D = h_ref.shape
    ones_col = jnp.ones((N, 1), jnp.bfloat16)   # hoisted out of the unrolled loop

    outs = []
    for g in range(G):                          # static unroll; G is small (<= batch)
        adj = adj_ref[g]                        # (N, N) bf16
        h = h_ref[g]                            # (N, D) f32
        h_bf = h.astype(jnp.bfloat16)

        # One MXU pass yields both A @ h and the in-degree (ones-column trick).
        # deg is exact: 0/1 entries and the ones column are exact in bf16 and
        # accumulation is f32. No N x N f32 copy of adj is ever materialized.
        h_aug = jnp.concatenate([h_bf, ones_col], axis=-1)                  # (N, D+1)
        t1_full = jnp.dot(adj, h_aug, preferred_element_type=jnp.float32)   # (N, D+1)
        deg = t1_full[:, D:D + 1]                                           # (N, 1)

        # 1/deg on the EUP; the select (not a multiply) keeps isolated nodes
        # (deg == 0) at exactly 0 -- do not refactor the mask after the product.
        inv = jnp.where(deg > 0.0, pl.reciprocal(deg, approx=True), 0.0)

        t1 = inv * t1_full[:, :D]               # mean aggregation, hop 1 (f32)
        # NOTE: t1 is rounded to bf16 for the second hop (same precision policy
        # as the bf16 adjacency matmul); keep it f32 here if tighter parity with
        # the full-f32 PyTorch math is ever required -- compute is free at this size.
        t2 = inv * jnp.dot(adj, t1.astype(jnp.bfloat16),
                           preferred_element_type=jnp.float32)              # hop 2

        # res = h + out0 + 0.5*out1 folded: 2.5*h + 2*t1 + 0.5*t2  (f32 math).
        outs.append(2.5 * h + 2.0 * t1 + 0.5 * t2)

    # Single lane-dense store: per-graph D=32 would be a masked 32-lane store;
    # the concatenated (N, G*D) slab is a multiple of 128 lanes -> unmasked vst.
    out_ref[...] = jnp.concatenate(outs, axis=-1)


def _tensorcores_per_chip():
    """v7x has 2 TensorCores per chip; v5e/v6e have 1. Falls back to 1 (always
    correct, just leaves the second v7x core idle) if detection fails."""
    try:
        kind = jax.devices()[0].device_kind.lower()
    except Exception:
        return 1
    return 2 if "v7" in kind else 1


def sagenet_forward(adj, h):
    """adj: (B, N, N) or (N, N) {0,1} dense adjacency (dst x src), ideally bf16.
       h:   (B, N, D) or (N, D) float32 node features.
       Returns (B, N, D) / (N, D) float32: SAGENet('mean', 2 layers, eval) output."""
    squeeze = adj.ndim == 2
    if squeeze:
        adj = adj[None]
        h = h[None]
    B, N, _ = adj.shape
    D = h.shape[-1]

    if adj.dtype != jnp.bfloat16:
        adj = adj.astype(jnp.bfloat16)
    if h.dtype != jnp.float32:
        h = h.astype(jnp.float32)

    # One grid step per TensorCore: 1 block on v5e/v6e, 2 "parallel" blocks on
    # v7x so both cores get exactly one step. (Per-graph work is ~1 MFLOP /
    # ~24 KiB DMA, so per-step overhead dominated the previous grid=(B,) layout.)
    cores = _tensorcores_per_chip()
    num_blocks = cores if (cores > 1 and B % cores == 0) else 1
    G = B // num_blocks
    # VMEM per block (double-buffered): adj G*N*N*2B + h/out G*N*D*4B each --
    # hundreds of KiB at these shapes, far under every generation's limit.
    # TODO(synk): for large N add a K (source-node) grid axis marked "arbitrary"
    # with an f32 accumulator so the adj block stays within v7x's 64 MiB VMEM.

    slab = pl.pallas_call(
        sagenet_kernel,
        out_shape=jax.ShapeDtypeStruct((num_blocks, N, G * D), jnp.float32),
        grid_spec=pltpu.PrefetchScalarGridSpec(
            num_scalar_prefetch=0,
            grid=(num_blocks,),
            in_specs=[
                pl.BlockSpec((G, N, N), lambda b: (b, 0, 0)),   # this block's graphs
                pl.BlockSpec((G, N, D), lambda b: (b, 0, 0)),   # this block's features
            ],
            out_specs=pl.BlockSpec((None, N, G * D), lambda b: (b, 0, 0)),
        ),
        compiler_params=pltpu.CompilerParams(
            dimension_semantics=("parallel",),   # independent blocks -> megacore split
        ),
    )(adj, h)

    # Undo the lane-dense packing (pure layout plumbing in the wrapper):
    # (num_blocks, N, G*D) -> (num_blocks, N, G, D) -> (num_blocks, G, N, D) -> (B, N, D)
    out = slab.reshape(num_blocks, N, G, D).transpose(0, 2, 1, 3).reshape(B, N, D)
    return out[0] if squeeze else out


# ----------------------- pure-JAX reference (sanity) -----------------------

def _ref_single_f32(adj_f32, h):
    # Full-f32 reference matching the PyTorch module's math exactly.
    deg = jnp.sum(adj_f32, axis=-1, keepdims=True)
    inv = jnp.where(deg > 0, 1.0 / deg, 0.0)
    anorm = adj_f32 * inv
    out0 = h + anorm @ h
    out1 = out0 + anorm @ out0
    return h + out0 + 0.5 * out1


if __name__ == "__main__":
    key = jax.random.PRNGKey(0)
    B, N, D = 8, 64, 32          # 8 small graphs, 64 nodes each, feature dim 32
    k_adj, k_h = jax.random.split(key)

    # Random directed graphs as dense {0,1} adjacencies (dst x src), generated
    # directly in bf16 so no f32 adjacency copy is ever materialized in HBM.
    adj = jax.random.bernoulli(k_adj, p=0.1, shape=(B, N, N)).astype(jnp.bfloat16)
    h = jax.random.normal(k_h, (B, N, D), dtype=jnp.float32)

    # NOTE: SAGEConv.__init__ declares fc_neigh / fc_self per layer, but the
    # given forward ('mean', in_feats == out_feats so lin_before_mp = False)
    # never applies them, so this code path has no learnable parameters.

    res = sagenet_forward(adj, h)
    jax.block_until_ready(res)
    assert res.shape == (B, N, D)

    # Full-f32 PyTorch-equivalent reference (tolerance covers the bf16 MXU
    # rounding and the EUP approximate reciprocal).
    ref_f32 = jax.vmap(_ref_single_f32)(adj.astype(jnp.float32), h)
    assert jnp.allclose(res, ref_f32, atol=5e-2, rtol=5e-2), \
        float(jnp.max(jnp.abs(res - ref_f32)))

    print("KERNEL_OK")
</pallas_src>

<mosaic_0001>
module attributes {stable_mosaic.version = 11 : i64} {
  func.func @sagenet_kernel(%arg0: i32, %arg1: memref<8x64x64xbf16, #tpu.memory_space<vmem>>, %arg2: memref<8x64x32xf32, #tpu.memory_space<vmem>>, %arg3: memref<1x64x256xf32, #tpu.memory_space<vmem>>) attributes {dimension_semantics = [#tpu.dimension_semantics<parallel>], iteration_bounds = array<i64: 1>, scalar_prefetch = 0 : i64, scratch_operands = 0 : i64, tpu.core_type = #tpu.core_type<tc>, window_params = [{transform_indices = @transform_0, window_bounds = array<i64: 8, 64, 64>}, {transform_indices = @transform_1, window_bounds = array<i64: 8, 64, 32>}, {transform_indices = @transform_2, window_bounds = array<i64: 1, 64, 256>}]} {
    %cst = arith.constant 1.000000e+00 : bf16
    %0 = vector.broadcast %cst : bf16 to vector<64x1xbf16>
    %c0 = arith.constant 0 : index
    %c0_0 = arith.constant 0 : index
    %c0_1 = arith.constant 0 : index
    %1 = vector.load %arg1[%c0, %c0_0, %c0_1] : memref<8x64x64xbf16, #tpu.memory_space<vmem>>, vector<1x64x64xbf16>
    %2 = vector.shape_cast %1 : vector<1x64x64xbf16> to vector<64x64xbf16>
    %c0_2 = arith.constant 0 : index
    %c0_3 = arith.constant 0 : index
    %c0_4 = arith.constant 0 : index
    %3 = vector.load %arg2[%c0_2, %c0_3, %c0_4] : memref<8x64x32xf32, #tpu.memory_space<vmem>>, vector<1x64x32xf32>
    %4 = vector.shape_cast %3 : vector<1x64x32xf32> to vector<64x32xf32>
    %5 = arith.truncf %4 : vector<64x32xf32> to vector<64x32xbf16>
    %6 = tpu.concatenate %5, %0 in 1 : vector<64x32xbf16>, vector<64x1xbf16> -> vector<64x33xbf16>
    %cst_5 = arith.constant dense<0.000000e+00> : vector<64x33xf32>
    %7 = tpu.matmul %2, %6, %cst_5 {dimension_numbers = #tpu.dot_dimension_numbers<[1], [0], [0], [1], [0, 0, 1, 1], [], []>} : vector<64x64xbf16>, vector<64x33xbf16>, vector<64x33xf32> -> vector<64x33xf32>
    %8 = vector.extract_strided_slice %7 {offsets = [0, 32], sizes = [64, 1], strides = [1, 1]} : vector<64x33xf32> to vector<64x1xf32>
    %cst_6 = arith.constant 0.000000e+00 : f32
    %9 = vector.broadcast %cst_6 : f32 to vector<64x1xf32>
    %10 = arith.cmpf ogt, %8, %9 : vector<64x1xf32>
    %11 = tpu.reciprocal %8 {approx = true} : vector<64x1xf32> -> vector<64x1xf32>
    %cst_7 = arith.constant 0.000000e+00 : f32
    %12 = vector.broadcast %cst_7 : f32 to vector<64x1xf32>
    %13 = arith.select %10, %11, %12 : vector<64x1xi1>, vector<64x1xf32>
    %14 = vector.extract_strided_slice %7 {offsets = [0, 0], sizes = [64, 32], strides = [1, 1]} : vector<64x33xf32> to vector<64x32xf32>
    %15 = vector.broadcast %13 : vector<64x1xf32> to vector<64x32xf32>
    %16 = arith.mulf %15, %14 : vector<64x32xf32>
    %17 = arith.truncf %16 : vector<64x32xf32> to vector<64x32xbf16>
    %cst_8 = arith.constant dense<0.000000e+00> : vector<64x32xf32>
    %18 = tpu.matmul %2, %17, %cst_8 {dimension_numbers = #tpu.dot_dimension_numbers<[1], [0], [0], [1], [0, 0, 1, 1], [], []>} : vector<64x64xbf16>, vector<64x32xbf16>, vector<64x32xf32> -> vector<64x32xf32>
    %19 = vector.broadcast %13 : vector<64x1xf32> to vector<64x32xf32>
    %20 = arith.mulf %19, %18 : vector<64x32xf32>
    %cst_9 = arith.constant 2.500000e+00 : f32
    %21 = vector.broadcast %cst_9 : f32 to vector<64x32xf32>
    %22 = arith.mulf %21, %4 : vector<64x32xf32>
    %cst_10 = arith.constant 2.000000e+00 : f32
    %23 = vector.broadcast %cst_10 : f32 to vector<64x32xf32>
    %24 = arith.mulf %23, %16 : vector<64x32xf32>
    %25 = arith.addf %22, %24 : vector<64x32xf32>
    %cst_11 = arith.constant 5.000000e-01 : f32
    %26 = vector.broadcast %cst_11 : f32 to vector<64x32xf32>
    %27 = arith.mulf %26, %20 : vector<64x32xf32>
    %28 = arith.addf %25, %27 : vector<64x32xf32>
    %c1 = arith.constant 1 : index
    %c0_12 = arith.constant 0 : index
    %c0_13 = arith.constant 0 : index
    %29 = vector.load %arg1[%c1, %c0_12, %c0_13] : memref<8x64x64xbf16, #tpu.memory_space<vmem>>, vector<1x64x64xbf16>
    %30 = vector.shape_cast %29 : vector<1x64x64xbf16> to vector<64x64xbf16>
    %c1_14 = arith.constant 1 : index
    %c0_15 = arith.constant 0 : index
    %c0_16 = arith.constant 0 : index
    %31 = vector.load %arg2[%c1_14, %c0_15, %c0_16] : memref<8x64x32xf32, #tpu.memory_space<vmem>>, vector<1x64x32xf32>
    %32 = vector.shape_cast %31 : vector<1x64x32xf32> to vector<64x32xf32>
    %33 = arith.truncf %32 : vector<64x32xf32> to vector<64x32xbf16>
    %34 = tpu.concatenate %33, %0 in 1 : vector<64x32xbf16>, vector<64x1xbf16> -> vector<64x33xbf16>
    %cst_17 = arith.constant dense<0.000000e+00> : vector<64x33xf32>
    %35 = tpu.matmul %30, %34, %cst_17 {dimension_numbers = #tpu.dot_dimension_numbers<[1], [0], [0], [1], [0, 0, 1, 1], [], []>} : vector<64x64xbf16>, vector<64x33xbf16>, vector<64x33xf32> -> vector<64x33xf32>
    %36 = vector.extract_strided_slice %35 {offsets = [0, 32], sizes = [64, 1], strides = [1, 1]} : vector<64x33xf32> to vector<64x1xf32>
    %cst_18 = arith.constant 0.000000e+00 : f32
    %37 = vector.broadcast %cst_18 : f32 to vector<64x1xf32>
    %38 = arith.cmpf ogt, %36, %37 : vector<64x1xf32>
    %39 = tpu.reciprocal %36 {approx = true} : vector<64x1xf32> -> vector<64x1xf32>
    %cst_19 = arith.constant 0.000000e+00 : f32
    %40 = vector.broadcast %cst_19 : f32 to vector<64x1xf32>
    %41 = arith.select %38, %39, %40 : vector<64x1xi1>, vector<64x1xf32>
    %42 = vector.extract_strided_slice %35 {offsets = [0, 0], sizes = [64, 32], strides = [1, 1]} : vector<64x33xf32> to vector<64x32xf32>
    %43 = vector.broadcast %41 : vector<64x1xf32> to vector<64x32xf32>
    %44 = arith.mulf %43, %42 : vector<64x32xf32>
    %45 = arith.truncf %44 : vector<64x32xf32> to vector<64x32xbf16>
    %cst_20 = arith.constant dense<0.000000e+00> : vector<64x32xf32>
    %46 = tpu.matmul %30, %45, %cst_20 {dimension_numbers = #tpu.dot_dimension_numbers<[1], [0], [0], [1], [0, 0, 1, 1], [], []>} : vector<64x64xbf16>, vector<64x32xbf16>, vector<64x32xf32> -> vector<64x32xf32>
    %47 = vector.broadcast %41 : vector<64x1xf32> to vector<64x32xf32>
    %48 = arith.mulf %47, %46 : vector<64x32xf32>
    %cst_21 = arith.constant 2.500000e+00 : f32
    %49 = vector.broadcast %cst_21 : f32 to vector<64x32xf32>
    %50 = arith.mulf %49, %32 : vector<64x32xf32>
    %cst_22 = arith.constant 2.000000e+00 : f32
    %51 = vector.broadcast %cst_22 : f32 to vector<64x32xf32>
    %52 = arith.mulf %51, %44 : vector<64x32xf32>
    %53 = arith.addf %50, %52 : vector<64x32xf32>
    %cst_23 = arith.constant 5.000000e-01 : f32
    %54 = vector.broadcast %cst_23 : f32 to vector<64x32xf32>
    %55 = arith.mulf %54, %48 : vector<64x32xf32>
    %56 = arith.addf %53, %55 : vector<64x32xf32>
    %c2 = arith.constant 2 : index
    %c0_24 = arith.constant 0 : index
    %c0_25 = arith.constant 0 : index
    %57 = vector.load %arg1[%c2, %c0_24, %c0_25] : memref<8x64x64xbf16, #tpu.memory_space<vmem>>, vector<1x64x64xbf16>
    %58 = vector.shape_cast %57 : vector<1x64x64xbf16> to vector<64x64xbf16>
    %c2_26 = arith.constant 2 : index
    %c0_27 = arith.constant 0 : index
    %c0_28 = arith.constant 0 : index
    %59 = vector.load %arg2[%c2_26, %c0_27, %c0_28] : memref<8x64x32xf32, #tpu.memory_space<vmem>>, vector<1x64x32xf32>
    %60 = vector.shape_cast %59 : vector<1x64x32xf32> to vector<64x32xf32>
    %61 = arith.truncf %60 : vector<64x32xf32> to vector<64x32xbf16>
    %62 = tpu.concatenate %61, %0 in 1 : vector<64x32xbf16>, vector<64x1xbf16> -> vector<64x33xbf16>
    %cst_29 = arith.constant dense<0.000000e+00> : vector<64x33xf32>
    %63 = tpu.matmul %58, %62, %cst_29 {dimension_numbers = #tpu.dot_dimension_numbers<[1], [0], [0], [1], [0, 0, 1, 1], [], []>} : vector<64x64xbf16>, vector<64x33xbf16>, vector<64x33xf32> -> vector<64x33xf32>
    %64 = vector.extract_strided_slice %63 {offsets = [0, 32], sizes = [64, 1], strides = [1, 1]} : vector<64x33xf32> to vector<64x1xf32>
    %cst_30 = arith.constant 0.000000e+00 : f32
    %65 = vector.broadcast %cst_30 : f32 to vector<64x1xf32>
    %66 = arith.cmpf ogt, %64, %65 : vector<64x1xf32>
    %67 = tpu.reciprocal %64 {approx = true} : vector<64x1xf32> -> vector<64x1xf32>
    %cst_31 = arith.constant 0.000000e+00 : f32
    %68 = vector.broadcast %cst_31 : f32 to vector<64x1xf32>
    %69 = arith.select %66, %67, %68 : vector<64x1xi1>, vector<64x1xf32>
    %70 = vector.extract_strided_slice %63 {offsets = [0, 0], sizes = [64, 32], strides = [1, 1]} : vector<64x33xf32> to vector<64x32xf32>
    %71 = vector.broadcast %69 : vector<64x1xf32> to vector<64x32xf32>
    %72 = arith.mulf %71, %70 : vector<64x32xf32>
    %73 = arith.truncf %72 : vector<64x32xf32> to vector<64x32xbf16>
    %cst_32 = arith.constant dense<0.000000e+00> : vector<64x32xf32>
    %74 = tpu.matmul %58, %73, %cst_32 {dimension_numbers = #tpu.dot_dimension_numbers<[1], [0], [0], [1], [0, 0, 1, 1], [], []>} : vector<64x64xbf16>, vector<64x32xbf16>, vector<64x32xf32> -> vector<64x32xf32>
    %75 = vector.broadcast %69 : vector<64x1xf32> to vector<64x32xf32>
    %76 = arith.mulf %75, %74 : vector<64x32xf32>
    %cst_33 = arith.constant 2.500000e+00 : f32
    %77 = vector.broadcast %cst_33 : f32 to vector<64x32xf32>
    %78 = arith.mulf %77, %60 : vector<64x32xf32>
    %cst_34 = arith.constant 2.000000e+00 : f32
    %79 = vector.broadcast %cst_34 : f32 to vector<64x32xf32>
    %80 = arith.mulf %79, %72 : vector<64x32xf32>
    %81 = arith.addf %78, %80 : vector<64x32xf32>
    %cst_35 = arith.constant 5.000000e-01 : f32
    %82 = vector.broadcast %cst_35 : f32 to vector<64x32xf32>
    %83 = arith.mulf %82, %76 : vector<64x32xf32>
    %84 = arith.addf %81, %83 : vector<64x32xf32>
    %c3 = arith.constant 3 : index
    %c0_36 = arith.constant 0 : index
    %c0_37 = arith.constant 0 : index
    %85 = vector.load %arg1[%c3, %c0_36, %c0_37] : memref<8x64x64xbf16, #tpu.memory_space<vmem>>, vector<1x64x64xbf16>
    %86 = vector.shape_cast %85 : vector<1x64x64xbf16> to vector<64x64xbf16>
    %c3_38 = arith.constant 3 : index
    %c0_39 = arith.constant 0 : index
    %c0_40 = arith.constant 0 : index
    %87 = vector.load %arg2[%c3_38, %c0_39, %c0_40] : memref<8x64x32xf32, #tpu.memory_space<vmem>>, vector<1x64x32xf32>
    %88 = vector.shape_cast %87 : vector<1x64x32xf32> to vector<64x32xf32>
    %89 = arith.truncf %88 : vector<64x32xf32> to vector<64x32xbf16>
    %90 = tpu.concatenate %89, %0 in 1 : vector<64x32xbf16>, vector<64x1xbf16> -> vector<64x33xbf16>
    %cst_41 = arith.constant dense<0.000000e+00> : vector<64x33xf32>
    %91 = tpu.matmul %86, %90, %cst_41 {dimension_numbers = #tpu.dot_dimension_numbers<[1], [0], [0], [1], [0, 0, 1, 1], [], []>} : vector<64x64xbf16>, vector<64x33xbf16>, vector<64x33xf32> -> vector<64x33xf32>
    %92 = vector.extract_strided_slice %91 {offsets = [0, 32], sizes = [64, 1], strides = [1, 1]} : vector<64x33xf32> to vector<64x1xf32>
    %cst_42 = arith.constant 0.000000e+00 : f32
    %93 = vector.broadcast %cst_42 : f32 to vector<64x1xf32>
    %94 = arith.cmpf ogt, %92, %93 : vector<64x1xf32>
    %95 = tpu.reciprocal %92 {approx = true} : vector<64x1xf32> -> vector<64x1xf32>
    %cst_43 = arith.constant 0.000000e+00 : f32
    %96 = vector.broadcast %cst_43 : f32 to vector<64x1xf32>
    %97 = arith.select %94, %95, %96 : vector<64x1xi1>, vector<64x1xf32>
    %98 = vector.extract_strided_slice %91 {offsets = [0, 0], sizes = [64, 32], strides = [1, 1]} : vector<64x33xf32> to vector<64x32xf32>
    %99 = vector.broadcast %97 : vector<64x1xf32> to vector<64x32xf32>
    %100 = arith.mulf %99, %98 : vector<64x32xf32>
    %101 = arith.truncf %100 : vector<64x32xf32> to vector<64x32xbf16>
    %cst_44 = arith.constant dense<0.000000e+00> : vector<64x32xf32>
    %102 = tpu.matmul %86, %101, %cst_44 {dimension_numbers = #tpu.dot_dimension_numbers<[1], [0], [0], [1], [0, 0, 1, 1], [], []>} : vector<64x64xbf16>, vector<64x32xbf16>, vector<64x32xf32> -> vector<64x32xf32>
    %103 = vector.broadcast %97 : vector<64x1xf32> to vector<64x32xf32>
    %104 = arith.mulf %103, %102 : vector<64x32xf32>
    %cst_45 = arith.constant 2.500000e+00 : f32
    %105 = vector.broadcast %cst_45 : f32 to vector<64x32xf32>
    %106 = arith.mulf %105, %88 : vector<64x32xf32>
    %cst_46 = arith.constant 2.000000e+00 : f32
    %107 = vector.broadcast %cst_46 : f32 to vector<64x32xf32>
    %108 = arith.mulf %107, %100 : vector<64x32xf32>
    %109 = arith.addf %106, %108 : vector<64x32xf32>
    %cst_47 = arith.constant 5.000000e-01 : f32
    %110 = vector.broadcast %cst_47 : f32 to vector<64x32xf32>
    %111 = arith.mulf %110, %104 : vector<64x32xf32>
    %112 = arith.addf %109, %111 : vector<64x32xf32>
    %c4 = arith.constant 4 : index
    %c0_48 = arith.constant 0 : index
    %c0_49 = arith.constant 0 : index
    %113 = vector.load %arg1[%c4, %c0_48, %c0_49] : memref<8x64x64xbf16, #tpu.memory_space<vmem>>, vector<1x64x64xbf16>
    %114 = vector.shape_cast %113 : vector<1x64x64xbf16> to vector<64x64xbf16>
    %c4_50 = arith.constant 4 : index
    %c0_51 = arith.constant 0 : index
    %c0_52 = arith.constant 0 : index
    %115 = vector.load %arg2[%c4_50, %c0_51, %c0_52] : memref<8x64x32xf32, #tpu.memory_space<vmem>>, vector<1x64x32xf32>
    %116 = vector.shape_cast %115 : vector<1x64x32xf32> to vector<64x32xf32>
    %117 = arith.truncf %116 : vector<64x32xf32> to vector<64x32xbf16>
    %118 = tpu.concatenate %117, %0 in 1 : vector<64x32xbf16>, vector<64x1xbf16> -> vector<64x33xbf16>
    %cst_53 = arith.constant dense<0.000000e+00> : vector<64x33xf32>
    %119 = tpu.matmul %114, %118, %cst_53 {dimension_numbers = #tpu.dot_dimension_numbers<[1], [0], [0], [1], [0, 0, 1, 1], [], []>} : vector<64x64xbf16>, vector<64x33xbf16>, vector<64x33xf32> -> vector<64x33xf32>
    %120 = vector.extract_strided_slice %119 {offsets = [0, 32], sizes = [64, 1], strides = [1, 1]} : vector<64x33xf32> to vector<64x1xf32>
    %cst_54 = arith.constant 0.000000e+00 : f32
    %121 = vector.broadcast %cst_54 : f32 to vector<64x1xf32>
    %122 = arith.cmpf ogt, %120, %121 : vector<64x1xf32>
    %123 = tpu.reciprocal %120 {approx = true} : vector<64x1xf32> -> vector<64x1xf32>
    %cst_55 = arith.constant 0.000000e+00 : f32
    %124 = vector.broadcast %cst_55 : f32 to vector<64x1xf32>
    %125 = arith.select %122, %123, %124 : vector<64x1xi1>, vector<64x1xf32>
    %126 = vector.extract_strided_slice %119 {offsets = [0, 0], sizes = [64, 32], strides = [1, 1]} : vector<64x33xf32> to vector<64x32xf32>
    %127 = vector.broadcast %125 : vector<64x1xf32> to vector<64x32xf32>
    %128 = arith.mulf %127, %126 : vector<64x32xf32>
    %129 = arith.truncf %128 : vector<64x32xf32> to vector<64x32xbf16>
    %cst_56 = arith.constant dense<0.000000e+00> : vector<64x32xf32>
    %130 = tpu.matmul %114, %129, %cst_56 {dimension_numbers = #tpu.dot_dimension_numbers<[1], [0], [0], [1], [0, 0, 1, 1], [], []>} : vector<64x64xbf16>, vector<64x32xbf16>, vector<64x32xf32> -> vector<64x32xf32>
    %131 = vector.broadcast %125 : vector<64x1xf32> to vector<64x32xf32>
    %132 = arith.mulf %131, %130 : vector<64x32xf32>
    %cst_57 = arith.constant 2.500000e+00 : f32
    %133 = vector.broadcast %cst_57 : f32 to vector<64x32xf32>
    %134 = arith.mulf %133, %116 : vector<64x32xf32>
    %cst_58 = arith.constant 2.000000e+00 : f32
    %135 = vector.broadcast %cst_58 : f32 to vector<64x32xf32>
    %136 = arith.mulf %135, %128 : vector<64x32xf32>
    %137 = arith.addf %134, %136 : vector<64x32xf32>
    %cst_59 = arith.constant 5.000000e-01 : f32
    %138 = vector.broadcast %cst_59 : f32 to vector<64x32xf32>
    %139 = arith.mulf %138, %132 : vector<64x32xf32>
    %140 = arith.addf %137, %139 : vector<64x32xf32>
    %c5 = arith.constant 5 : index
    %c0_60 = arith.constant 0 : index
    %c0_61 = arith.constant 0 : index
    %141 = vector.load %arg1[%c5, %c0_60, %c0_61] : memref<8x64x64xbf16, #tpu.memory_space<vmem>>, vector<1x64x64xbf16>
    %142 = vector.shape_cast %141 : vector<1x64x64xbf16> to vector<64x64xbf16>
    %c5_62 = arith.constant 5 : index
    %c0_63 = arith.constant 0 : index
    %c0_64 = arith.constant 0 : index
    %143 = vector.load %arg2[%c5_62, %c0_63, %c0_64] : memref<8x64x32xf32, #tpu.memory_space<vmem>>, vector<1x64x32xf32>
    %144 = vector.shape_cast %143 : vector<1x64x32xf32> to vector<64x32xf32>
    %145 = arith.truncf %144 : vector<64x32xf32> to vector<64x32xbf16>
    %146 = tpu.concatenate %145, %0 in 1 : vector<64x32xbf16>, vector<64x1xbf16> -> vector<64x33xbf16>
    %cst_65 = arith.constant dense<0.000000e+00> : vector<64x33xf32>
    %147 = tpu.matmul %142, %146, %cst_65 {dimension_numbers = #tpu.dot_dimension_numbers<[1], [0], [0], [1], [0, 0, 1, 1], [], []>} : vector<64x64xbf16>, vector<64x33xbf16>, vector<64x33xf32> -> vector<64x33xf32>
    %148 = vector.extract_strided_slice %147 {offsets = [0, 32], sizes = [64, 1], strides = [1, 1]} : vector<64x33xf32> to vector<64x1xf32>
    %cst_66 = arith.constant 0.000000e+00 : f32
    %149 = vector.broadcast %cst_66 : f32 to vector<64x1xf32>
    %150 = arith.cmpf ogt, %148, %149 : vector<64x1xf32>
    %151 = tpu.reciprocal %148 {approx = true} : vector<64x1xf32> -> vector<64x1xf32>
    %cst_67 = arith.constant 0.000000e+00 : f32
    %152 = vector.broadcast %cst_67 : f32 to vector<64x1xf32>
    %153 = arith.select %150, %151, %152 : vector<64x1xi1>, vector<64x1xf32>
    %154 = vector.extract_strided_slice %147 {offsets = [0, 0], sizes = [64, 32], strides = [1, 1]} : vector<64x33xf32> to vector<64x32xf32>
    %155 = vector.broadcast %153 : vector<64x1xf32> to vector<64x32xf32>
    %156 = arith.mulf %155, %154 : vector<64x32xf32>
    %157 = arith.truncf %156 : vector<64x32xf32> to vector<64x32xbf16>
    %cst_68 = arith.constant dense<0.000000e+00> : vector<64x32xf32>
    %158 = tpu.matmul %142, %157, %cst_68 {dimension_numbers = #tpu.dot_dimension_numbers<[1], [0], [0], [1], [0, 0, 1, 1], [], []>} : vector<64x64xbf16>, vector<64x32xbf16>, vector<64x32xf32> -> vector<64x32xf32>
    %159 = vector.broadcast %153 : vector<64x1xf32> to vector<64x32xf32>
    %160 = arith.mulf %159, %158 : vector<64x32xf32>
    %cst_69 = arith.constant 2.500000e+00 : f32
    %161 = vector.broadcast %cst_69 : f32 to vector<64x32xf32>
    %162 = arith.mulf %161, %144 : vector<64x32xf32>
    %cst_70 = arith.constant 2.000000e+00 : f32
    %163 = vector.broadcast %cst_70 : f32 to vector<64x32xf32>
    %164 = arith.mulf %163, %156 : vector<64x32xf32>
    %165 = arith.addf %162, %164 : vector<64x32xf32>
    %cst_71 = arith.constant 5.000000e-01 : f32
    %166 = vector.broadcast %cst_71 : f32 to vector<64x32xf32>
    %167 = arith.mulf %166, %160 : vector<64x32xf32>
    %168 = arith.addf %165, %167 : vector<64x32xf32>
    %c6 = arith.constant 6 : index
    %c0_72 = arith.constant 0 : index
    %c0_73 = arith.constant 0 : index
    %169 = vector.load %arg1[%c6, %c0_72, %c0_73] : memref<8x64x64xbf16, #tpu.memory_space<vmem>>, vector<1x64x64xbf16>
    %170 = vector.shape_cast %169 : vector<1x64x64xbf16> to vector<64x64xbf16>
    %c6_74 = arith.constant 6 : index
    %c0_75 = arith.constant 0 : index
    %c0_76 = arith.constant 0 : index
    %171 = vector.load %arg2[%c6_74, %c0_75, %c0_76] : memref<8x64x32xf32, #tpu.memory_space<vmem>>, vector<1x64x32xf32>
    %172 = vector.shape_cast %171 : vector<1x64x32xf32> to vector<64x32xf32>
    %173 = arith.truncf %172 : vector<64x32xf32> to vector<64x32xbf16>
    %174 = tpu.concatenate %173, %0 in 1 : vector<64x32xbf16>, vector<64x1xbf16> -> vector<64x33xbf16>
    %cst_77 = arith.constant dense<0.000000e+00> : vector<64x33xf32>
    %175 = tpu.matmul %170, %174, %cst_77 {dimension_numbers = #tpu.dot_dimension_numbers<[1], [0], [0], [1], [0, 0, 1, 1], [], []>} : vector<64x64xbf16>, vector<64x33xbf16>, vector<64x33xf32> -> vector<64x33xf32>
    %176 = vector.extract_strided_slice %175 {offsets = [0, 32], sizes = [64, 1], strides = [1, 1]} : vector<64x33xf32> to vector<64x1xf32>
    %cst_78 = arith.constant 0.000000e+00 : f32
    %177 = vector.broadcast %cst_78 : f32 to vector<64x1xf32>
    %178 = arith.cmpf ogt, %176, %177 : vector<64x1xf32>
    %179 = tpu.reciprocal %176 {approx = true} : vector<64x1xf32> -> vector<64x1xf32>
    %cst_79 = arith.constant 0.000000e+00 : f32
    %180 = vector.broadcast %cst_79 : f32 to vector<64x1xf32>
    %181 = arith.select %178, %179, %180 : vector<64x1xi1>, vector<64x1xf32>
    %182 = vector.extract_strided_slice %175 {offsets = [0, 0], sizes = [64, 32], strides = [1, 1]} : vector<64x33xf32> to vector<64x32xf32>
    %183 = vector.broadcast %181 : vector<64x1xf32> to vector<64x32xf32>
    %184 = arith.mulf %183, %182 : vector<64x32xf32>
    %185 = arith.truncf %184 : vector<64x32xf32> to vector<64x32xbf16>
    %cst_80 = arith.constant dense<0.000000e+00> : vector<64x32xf32>
    %186 = tpu.matmul %170, %185, %cst_80 {dimension_numbers = #tpu.dot_dimension_numbers<[1], [0], [0], [1], [0, 0, 1, 1], [], []>} : vector<64x64xbf16>, vector<64x32xbf16>, vector<64x32xf32> -> vector<64x32xf32>
    %187 = vector.broadcast %181 : vector<64x1xf32> to vector<64x32xf32>
    %188 = arith.mulf %187, %186 : vector<64x32xf32>
    %cst_81 = arith.constant 2.500000e+00 : f32
    %189 = vector.broadcast %cst_81 : f32 to vector<64x32xf32>
    %190 = arith.mulf %189, %172 : vector<64x32xf32>
    %cst_82 = arith.constant 2.000000e+00 : f32
    %191 = vector.broadcast %cst_82 : f32 to vector<64x32xf32>
    %192 = arith.mulf %191, %184 : vector<64x32xf32>
    %193 = arith.addf %190, %192 : vector<64x32xf32>
    %cst_83 = arith.constant 5.000000e-01 : f32
    %194 = vector.broadcast %cst_83 : f32 to vector<64x32xf32>
    %195 = arith.mulf %194, %188 : vector<64x32xf32>
    %196 = arith.addf %193, %195 : vector<64x32xf32>
    %c7 = arith.constant 7 : index
    %c0_84 = arith.constant 0 : index
    %c0_85 = arith.constant 0 : index
    %197 = vector.load %arg1[%c7, %c0_84, %c0_85] : memref<8x64x64xbf16, #tpu.memory_space<vmem>>, vector<1x64x64xbf16>
    %198 = vector.shape_cast %197 : vector<1x64x64xbf16> to vector<64x64xbf16>
    %c7_86 = arith.constant 7 : index
    %c0_87 = arith.constant 0 : index
    %c0_88 = arith.constant 0 : index
    %199 = vector.load %arg2[%c7_86, %c0_87, %c0_88] : memref<8x64x32xf32, #tpu.memory_space<vmem>>, vector<1x64x32xf32>
    %200 = vector.shape_cast %199 : vector<1x64x32xf32> to vector<64x32xf32>
    %201 = arith.truncf %200 : vector<64x32xf32> to vector<64x32xbf16>
    %202 = tpu.concatenate %201, %0 in 1 : vector<64x32xbf16>, vector<64x1xbf16> -> vector<64x33xbf16>
    %cst_89 = arith.constant dense<0.000000e+00> : vector<64x33xf32>
    %203 = tpu.matmul %198, %202, %cst_89 {dimension_numbers = #tpu.dot_dimension_numbers<[1], [0], [0], [1], [0, 0, 1, 1], [], []>} : vector<64x64xbf16>, vector<64x33xbf16>, vector<64x33xf32> -> vector<64x33xf32>
    %204 = vector.extract_strided_slice %203 {offsets = [0, 32], sizes = [64, 1], strides = [1, 1]} : vector<64x33xf32> to vector<64x1xf32>
    %cst_90 = arith.constant 0.000000e+00 : f32
    %205 = vector.broadcast %cst_90 : f32 to vector<64x1xf32>
    %206 = arith.cmpf ogt, %204, %205 : vector<64x1xf32>
    %207 = tpu.reciprocal %204 {approx = true} : vector<64x1xf32> -> vector<64x1xf32>
    %cst_91 = arith.constant 0.000000e+00 : f32
    %208 = vector.broadcast %cst_91 : f32 to vector<64x1xf32>
    %209 = arith.select %206, %207, %208 : vector<64x1xi1>, vector<64x1xf32>
    %210 = vector.extract_strided_slice %203 {offsets = [0, 0], sizes = [64, 32], strides = [1, 1]} : vector<64x33xf32> to vector<64x32xf32>
    %211 = vector.broadcast %209 : vector<64x1xf32> to vector<64x32xf32>
    %212 = arith.mulf %211, %210 : vector<64x32xf32>
    %213 = arith.truncf %212 : vector<64x32xf32> to vector<64x32xbf16>
    %cst_92 = arith.constant dense<0.000000e+00> : vector<64x32xf32>
    %214 = tpu.matmul %198, %213, %cst_92 {dimension_numbers = #tpu.dot_dimension_numbers<[1], [0], [0], [1], [0, 0, 1, 1], [], []>} : vector<64x64xbf16>, vector<64x32xbf16>, vector<64x32xf32> -> vector<64x32xf32>
    %215 = vector.broadcast %209 : vector<64x1xf32> to vector<64x32xf32>
    %216 = arith.mulf %215, %214 : vector<64x32xf32>
    %cst_93 = arith.constant 2.500000e+00 : f32
    %217 = vector.broadcast %cst_93 : f32 to vector<64x32xf32>
    %218 = arith.mulf %217, %200 : vector<64x32xf32>
    %cst_94 = arith.constant 2.000000e+00 : f32
    %219 = vector.broadcast %cst_94 : f32 to vector<64x32xf32>
    %220 = arith.mulf %219, %212 : vector<64x32xf32>
    %221 = arith.addf %218, %220 : vector<64x32xf32>
    %cst_95 = arith.constant 5.000000e-01 : f32
    %222 = vector.broadcast %cst_95 : f32 to vector<64x32xf32>
    %223 = arith.mulf %222, %216 : vector<64x32xf32>
    %224 = arith.addf %221, %223 : vector<64x32xf32>
    %225 = tpu.concatenate %28, %56, %84, %112, %140, %168, %196, %224 in 1 : vector<64x32xf32>, vector<64x32xf32>, vector<64x32xf32>, vector<64x32xf32>, vector<64x32xf32>, vector<64x32xf32>, vector<64x32xf32>, vector<64x32xf32> -> vector<64x256xf32>
    %c0_96 = arith.constant 0 : index
    %c0_97 = arith.constant 0 : index
    %c0_98 = arith.constant 0 : index
    %226 = vector.load %arg3[%c0_96, %c0_97, %c0_98] : memref<1x64x256xf32, #tpu.memory_space<vmem>>, vector<1x64x256xf32>
    %227 = vector.shape_cast %226 : vector<1x64x256xf32> to vector<64x256xf32>
    %228 = vector.shape_cast %225 : vector<64x256xf32> to vector<1x64x256xf32>
    tpu.vector_store %arg3[%c0_96, %c0_97, %c0_98], %228 {strides = array<i32>} : memref<1x64x256xf32, #tpu.memory_space<vmem>>, vector<1x64x256xf32>,
    return
  }
  func.func @transform_0(%arg0: i32) -> (i32, i32, i32) {
    %c0_i32 = arith.constant 0 : i32
    %c0_i32_0 = arith.constant 0 : i32
    %c0_i32_1 = arith.constant 0 : i32
    return %arg0, %c0_i32, %c0_i32_0 : i32, i32, i32
  }
  func.func @transform_1(%arg0: i32) -> (i32, i32, i32) {
    %c0_i32 = arith.constant 0 : i32
    %c0_i32_0 = arith.constant 0 : i32
    %c0_i32_1 = arith.constant 0 : i32
    return %arg0, %c0_i32, %c0_i32_0 : i32, i32, i32
  }
  func.func @transform_2(%arg0: i32) -> (i32, i32, i32) {
    %c0_i32 = arith.constant 0 : i32
    %c0_i32_0 = arith.constant 0 : i32
    %c0_i32_1 = arith.constant 0 : i32
    return %arg0, %c0_i32, %c0_i32_0 : i32, i32, i32
  }
}

</mosaic_0001>

<llo_original>
// kernel: tpu_custom_call.1
$region0: #{tpu_custom_call.1}
  #allocation0 [shape = 'u32[]', space=smem, size = 0x4, offset = 0x4, fixed_abs, tag = 'smem constant byte address 0x4 - core index']
  #allocation1 [shape = 'u32[144,128]{1,0:T(1,128)}', space=vmem, size = 0x12000, scoped, tag = 'internal scratch']
  %s0 = inlined_call_operand.vmem [shape: bf16[8,64,64], index: 0, kind: input, shape index: {}]
  %s1 = inlined_call_operand.vmem [shape: f32[8,64,32], index: 1, kind: input, shape index: {}]
  %s2 = inlined_call_operand.hbm [shape: f32[1,64,256], index: 2, kind: output, shape index: {}]
  %s3 = sld [smem:[#allocation0]]
  $region18: #{tpu_custom_call.1} parent=0
    _
  %s5 = ssub.s32 1, %s3
  %s6 = scalar_select 0, %s5, %s3
  $region1: #{tpu_custom_call.1} parent=0
    #allocation2 [shape = 'u8[65536]{0}', space=vmem, size = 0x10000, scoped, tag = 'output window, operand 0, single buffered']
    #allocation3 [shape = 's32[1]{0}', space=sflag, size = 0x4, scoped, tag = 'scoped memory for tpu_custom_call.1']
    %7 = vsyncpa [#allocation3], 0
    // Predicated region
    $region2: #{tpu_custom_call.1} parent=1 // pred_check
      _
    $region3: #{tpu_custom_call.1} parent=1 // pred_check_branch
      %9 = sbr.rel (0) target = $region5
    $region4: #{tpu_custom_call.1} parent=1 // pred_region
      _
    $region5: #{tpu_custom_call.1} parent=1 // pred_fallthru
      _
    // Predicated region
    $region6: #{tpu_custom_call.1} parent=1 // pred_check
      _
    $region7: #{tpu_custom_call.1} parent=1 // pred_check_branch
      %11 = sbr.rel (0) target = $region9
    $region8: #{tpu_custom_call.1} parent=1 // pred_region
      _
    $region9: #{tpu_custom_call.1} parent=1 // pred_fallthru
      _
    %v14 = vld [vmem:[%s0] sm:$0xf]
    %v15 = vld [vmem:[%s0 + $0x4] sm:$0xf]
    %v16 = vld [vmem:[%s0 + $0x8] sm:$0xf]
    %v17 = vld [vmem:[%s0 + $0xc] sm:$0xf]
    %v18 = vld [vmem:[%s0 + $0x10] sm:$0xf]
    %v19 = vld [vmem:[%s0 + $0x14] sm:$0xf]
    %v20 = vld [vmem:[%s0 + $0x18] sm:$0xf]
    %v21 = vld [vmem:[%s0 + $0x1c] sm:$0xf]
    %v22 = vld [vmem:[%s1] sm:$0xff]
    %v23 = vld [vmem:[%s1 + $0x8] sm:$0xff]
    %v24 = vld [vmem:[%s1 + $0x10] sm:$0xff]
    %v25 = vld [vmem:[%s1 + $0x18] sm:$0xff]
    %v26 = vld [vmem:[%s1 + $0x20] sm:$0xff]
    %v27 = vld [vmem:[%s1 + $0x28] sm:$0xff]
    %v28 = vld [vmem:[%s1 + $0x30] sm:$0xff]
    %v29 = vld [vmem:[%s1 + $0x38] sm:$0xff]
    %v30 = vpack.c.bf16 %v23, %v22
    %v31 = vpack.c.bf16 %v25, %v24
    %v32 = vpack.c.bf16 %v27, %v26
    %v33 = vpack.c.bf16 %v29, %v28
    %vm34 = vcmask 261120
    %v37 = vsel %vm34, %v30, 1065369472
    %v40 = vsel %vm34, %v31, 1065369472
    %v43 = vsel %vm34, %v32, 1065369472
    %v46 = vsel %vm34, %v33, 1065369472
    %v56 = vunpack.c.l.b16 %v14
    %v57 = vunpack.c.l.b16 %v15
    %v58 = vunpack.c.l.b16 %v16
    %v59 = vunpack.c.l.b16 %v17
    %v60 = vunpack.c.l.b16 %v18
    %v61 = vunpack.c.l.b16 %v19
    %v62 = vunpack.c.l.b16 %v20
    %v63 = vunpack.c.l.b16 %v21
    %v64 = vpack.c.b16 %v57, %v56
    %v65 = vpack.c.b16 %v59, %v58
    %v66 = vpack.c.b16 %v61, %v60
    %v67 = vpack.c.b16 %v63, %v62
    %vm68 = vcmask 523264
    %v70 = vsel %vm68, %v64, 0
    %v73 = vsel %vm68, %v65, 0
    %v76 = vsel %vm68, %v66, 0
    %v79 = vsel %vm68, %v67, 0
    %81 = vmatprep.subr.bf16.mxu0 0
    %82 = vmatpush1.bf16.msra.mxu0 %v37
    %83 = vmatprep.subr.bf16.mxu0 0
    %84 = vmatpush1.bf16.msra.mxu0 %v40
    %85 = vmatprep.subr.bf16.mxu0 0
    %86 = vmatpush1.bf16.msra.mxu0 %v43
    %87 = vmatprep.subr.bf16.mxu0 0
    %88 = vmatpush1.bf16.msra.mxu0 %v46
    %89 = vmatprep.subr.bf16.mxu0 0
    %90 = vmatpush1.bf16.msra.mxu0 0
    %91 = vmatprep.subr.bf16.mxu0 0
    %92 = vmatpush1.bf16.msra.mxu0 0
    %93 = vmatprep.subr.bf16.mxu0 0
    %94 = vmatpush1.bf16.msra.mxu0 0
    %95 = vmatprep.subr.bf16.mxu0 0
    %96 = vmatpush1.bf16.msra.mxu0 0
    %97 = vmatprep.subr.bf16.mxu0 0
    %98 = vmatpush1.bf16.msra.mxu0 0
    %99 = vmatprep.subr.bf16.mxu0 0
    %100 = vmatpush1.bf16.msra.mxu0 0
    %101 = vmatprep.subr.bf16.mxu0 0
    %102 = vmatpush1.bf16.msra.mxu0 0
    %103 = vmatprep.subr.bf16.mxu0 0
    %104 = vmatpush1.bf16.msra.mxu0 0
    %105 = vmatprep.subr.bf16.mxu0 0
    %106 = vmatpush1.bf16.msra.mxu0 0
    %107 = vmatprep.subr.bf16.mxu0 0
    %108 = vmatpush1.bf16.msra.mxu0 0
    %109 = vmatprep.subr.bf16.mxu0 0
    %110 = vmatpush1.bf16.msra.mxu0 0
    %111 = vmatprep.subr.bf16.mxu0 0
    %112 = vmatpush1.bf16.msra.mxu0 0
    %113 = vmatprep.mubr.bf16.mxu0 0
    %114 = vmatmul.mubr.bf16.gmra.mrb[0].mxu0 %v70
    %v115 = vpop.f32.mrb[0].mxu0
    %v116 = vadd.f32 0.0, %v115
    %v117 = vpop.f32.mrb[0].mxu0
    %v118 = vpop.f32.mrb[0].mxu0
    %v119 = vadd.f32 0.0, %v118
    %v120 = vpop.f32.mrb[0].mxu0
    %121 = vmatprep.mubr.bf16.mxu0 0
    %122 = vmatmul.mubr.bf16.gmra.mrb[0].mxu0 %v73
    %v123 = vpop.f32.mrb[0].mxu0
    %v124 = vadd.f32 0.0, %v123
    %v125 = vpop.f32.mrb[0].mxu0
    %v126 = vpop.f32.mrb[0].mxu0
    %v127 = vadd.f32 0.0, %v126
    %v128 = vpop.f32.mrb[0].mxu0
    %129 = vmatprep.mubr.bf16.mxu0 0
    %130 = vmatmul.mubr.bf16.gmra.mrb[0].mxu0 %v76
    %v131 = vpop.f32.mrb[0].mxu0
    %v132 = vadd.f32 0.0, %v131
    %v133 = vpop.f32.mrb[0].mxu0
    %v134 = vpop.f32.mrb[0].mxu0
    %v135 = vadd.f32 0.0, %v134
    %v136 = vpop.f32.mrb[0].mxu0
    %137 = vmatprep.mubr.bf16.mxu0 0
    %138 = vmatmul.mubr.bf16.gmra.mrb[0].mxu0 %v79
    %v139 = vpop.f32.mrb[0].mxu0
    %v140 = vadd.f32 0.0, %v139
    %v141 = vpop.f32.mrb[0].mxu0
    %v142 = vpop.f32.mrb[0].mxu0
    %v143 = vadd.f32 0.0, %v142
    %v144 = vpop.f32.mrb[0].mxu0
    %145 = vdwg.mxu0
    %vm146 = vcmp.gt.f32.partialorder %v116, 0.0
    %vm147 = vcmp.gt.f32.partialorder %v119, 0.0
    %vm148 = vcmp.gt.f32.partialorder %v124, 0.0
    %vm149 = vcmp.gt.f32.partialorder %v127, 0.0
    %vm150 = vcmp.gt.f32.partialorder %v132, 0.0
    %vm151 = vcmp.gt.f32.partialorder %v135, 0.0
    %vm152 = vcmp.gt.f32.partialorder %v140, 0.0
    %vm153 = vcmp.gt.f32.partialorder %v143, 0.0
    %v154 = vrcp.pop %v116
    %v155 = vrcp.pop %v119
    %v156 = vrcp.pop %v124
    %v157 = vrcp.pop %v127
    %v158 = vrcp.pop %v132
    %v159 = vrcp.pop %v135
    %v160 = vrcp.pop %v140
    %v161 = vrcp.pop %v143
    %v162 = vsel %vm146, %v154, 0.0
    %v163 = vsel %vm147, %v155, 0.0
    %v164 = vsel %vm148, %v156, 0.0
    %v165 = vsel %vm149, %v157, 0.0
    %v166 = vsel %vm150, %v158, 0.0
    %v167 = vsel %vm151, %v159, 0.0
    %v168 = vsel %vm152, %v160, 0.0
    %v169 = vsel %vm153, %v161, 0.0
    %171 = vset.pattern.permute.xlu0 32
    %172 = vperm.xlu0 %171, %v162
    %v173 = vpop.permute.xlu0 %172
    %176 = vset.pattern.permute.xlu0 32
    %177 = vperm.xlu0 %176, %v163
    %v178 = vpop.permute.xlu0 %177
    %181 = vset.pattern.permute.xlu0 32
    %182 = vperm.xlu0 %181, %v164
    %v183 = vpop.permute.xlu0 %182
    %186 = vset.pattern.permute.xlu0 32
    %187 = vperm.xlu0 %186, %v165
    %v188 = vpop.permute.xlu0 %187
    %191 = vset.pattern.permute.xlu0 32
    %192 = vperm.xlu0 %191, %v166
    %v193 = vpop.permute.xlu0 %192
    %196 = vset.pattern.permute.xlu0 32
    %197 = vperm.xlu0 %196, %v167
    %v198 = vpop.permute.xlu0 %197
    %201 = vset.pattern.permute.xlu0 32
    %202 = vperm.xlu0 %201, %v168
    %v203 = vpop.permute.xlu0 %202
    %206 = vset.pattern.permute.xlu0 32
    %207 = vperm.xlu0 %206, %v169
    %v208 = vpop.permute.xlu0 %207
    %v210 = vmul.f32 %v173, %v116
    %v211 = vmul.f32 %v178, %v119
    %v212 = vmul.f32 %v183, %v124
    %v213 = vmul.f32 %v188, %v127
    %v214 = vmul.f32 %v193, %v132
    %v215 = vmul.f32 %v198, %v135
    %v216 = vmul.f32 %v203, %v140
    %v217 = vmul.f32 %v208, %v143
    %v218 = vpack.c.bf16 %v211, %v210
    %v219 = vpack.c.bf16 %v213, %v212
    %v220 = vpack.c.bf16 %v215, %v214
    %v221 = vpack.c.bf16 %v217, %v216
    %222 = vmatprep.subr.bf16.mxu0 0
    %223 = vmatpush1.bf16.msra.mxu0 %v218
    %224 = vmatprep.subr.bf16.mxu0 0
    %225 = vmatpush1.bf16.msra.mxu0 %v219
    %226 = vmatprep.subr.bf16.mxu0 0
    %227 = vmatpush1.bf16.msra.mxu0 %v220
    %228 = vmatprep.subr.bf16.mxu0 0
    %229 = vmatpush1.bf16.msra.mxu0 %v221
    %230 = vmatprep.subr.bf16.mxu0 0
    %231 = vmatpush1.bf16.msra.mxu0 0
    %232 = vmatprep.subr.bf16.mxu0 0
    %233 = vmatpush1.bf16.msra.mxu0 0
    %234 = vmatprep.subr.bf16.mxu0 0
    %235 = vmatpush1.bf16.msra.mxu0 0
    %236 = vmatprep.subr.bf16.mxu0 0
    %237 = vmatpush1.bf16.msra.mxu0 0
    %238 = vmatprep.subr.bf16.mxu0 0
    %239 = vmatpush1.bf16.msra.mxu0 0
    %240 = vmatprep.subr.bf16.mxu0 0
    %241 = vmatpush1.bf16.msra.mxu0 0
    %242 = vmatprep.subr.bf16.mxu0 0
    %243 = vmatpush1.bf16.msra.mxu0 0
    %244 = vmatprep.subr.bf16.mxu0 0
    %245 = vmatpush1.bf16.msra.mxu0 0
    %246 = vmatprep.subr.bf16.mxu0 0
    %247 = vmatpush1.bf16.msra.mxu0 0
    %248 = vmatprep.subr.bf16.mxu0 0
    %249 = vmatpush1.bf16.msra.mxu0 0
    %250 = vmatprep.subr.bf16.mxu0 0
    %251 = vmatpush1.bf16.msra.mxu0 0
    %252 = vmatprep.subr.bf16.mxu0 0
    %253 = vmatpush1.bf16.msra.mxu0 0
    %254 = vmatprep.mubr.bf16.mxu0 0
    %255 = vmatmul.mubr.bf16.gmra.mrb[0].mxu0 %v70
    %v256 = vpop.f32.mrb[0].mxu0
    %v257 = vadd.f32 0.0, %v256
    %v258 = vpop.f32.mrb[0].mxu0
    %v259 = vpop.f32.mrb[0].mxu0
    %v260 = vadd.f32 0.0, %v259
    %v261 = vpop.f32.mrb[0].mxu0
    %262 = vmatprep.mubr.bf16.mxu0 0
    %263 = vmatmul.mubr.bf16.gmra.mrb[0].mxu0 %v73
    %v264 = vpop.f32.mrb[0].mxu0
    %v265 = vadd.f32 0.0, %v264
    %v266 = vpop.f32.mrb[0].mxu0
    %v267 = vpop.f32.mrb[0].mxu0
    %v268 = vadd.f32 0.0, %v267
    %v269 = vpop.f32.mrb[0].mxu0
    %270 = vmatprep.mubr.bf16.mxu0 0
    %271 = vmatmul.mubr.bf16.gmra.mrb[0].mxu0 %v76
    %v272 = vpop.f32.mrb[0].mxu0
    %v273 = vadd.f32 0.0, %v272
    %v274 = vpop.f32.mrb[0].mxu0
    %v275 = vpop.f32.mrb[0].mxu0
    %v276 = vadd.f32 0.0, %v275
    %v277 = vpop.f32.mrb[0].mxu0
    %278 = vmatprep.mubr.bf16.mxu0 0
    %279 = vmatmul.mubr.bf16.gmra.mrb[0].mxu0 %v79
    %v280 = vpop.f32.mrb[0].mxu0
    %v281 = vadd.f32 0.0, %v280
    %v282 = vpop.f32.mrb[0].mxu0
    %v283 = vpop.f32.mrb[0].mxu0
    %v284 = vadd.f32 0.0, %v283
    %v285 = vpop.f32.mrb[0].mxu0
    %286 = vdwg.mxu0
    %v287 = vmul.f32 %v173, %v257
    %v288 = vmul.f32 %v178, %v260
    %v289 = vmul.f32 %v183, %v265
    %v290 = vmul.f32 %v188, %v268
    %v291 = vmul.f32 %v193, %v273
    %v292 = vmul.f32 %v198, %v276
    %v293 = vmul.f32 %v203, %v281
    %v294 = vmul.f32 %v208, %v284
    %v295 = vmul.f32 %v22, 2.5
    %v296 = vmul.f32 %v23, 2.5
    %v297 = vmul.f32 %v24, 2.5
    %v298 = vmul.f32 %v25, 2.5
    %v299 = vmul.f32 %v26, 2.5
    %v300 = vmul.f32 %v27, 2.5
    %v301 = vmul.f32 %v28, 2.5
    %v302 = vmul.f32 %v29, 2.5
    %v303 = vmul.f32 %v210, 2.0
    %v304 = vmul.f32 %v211, 2.0
    %v305 = vmul.f32 %v212, 2.0
    %v306 = vmul.f32 %v213, 2.0
    %v307 = vmul.f32 %v214, 2.0
    %v308 = vmul.f32 %v215, 2.0
    %v309 = vmul.f32 %v216, 2.0
    %v310 = vmul.f32 %v217, 2.0
    %v311 = vadd.f32 %v295, %v303
    %v312 = vadd.f32 %v296, %v304
    %v313 = vadd.f32 %v297, %v305
    %v314 = vadd.f32 %v298, %v306
    %v315 = vadd.f32 %v299, %v307
    %v316 = vadd.f32 %v300, %v308
    %v317 = vadd.f32 %v301, %v309
    %v318 = vadd.f32 %v302, %v310
    %v319 = vmul.f32 %v287, 0.5
    %v320 = vmul.f32 %v288, 0.5
    %v321 = vmul.f32 %v289, 0.5
    %v322 = vmul.f32 %v290, 0.5
    %v323 = vmul.f32 %v291, 0.5
    %v324 = vmul.f32 %v292, 0.5
    %v325 = vmul.f32 %v293, 0.5
    %v326 = vmul.f32 %v294, 0.5
    %v327 = vadd.f32 %v311, %v319
    %v328 = vadd.f32 %v312, %v320
    %v329 = vadd.f32 %v313, %v321
    %v330 = vadd.f32 %v314, %v322
    %v331 = vadd.f32 %v315, %v323
    %v332 = vadd.f32 %v316, %v324
    %v333 = vadd.f32 %v317, %v325
    %v334 = vadd.f32 %v318, %v326
    %s335 = scalar_lea.vmem %s0, 32
    %v336 = vld [vmem:[%s335] sm:$0xf]
    %v337 = vld [vmem:[%s335 + $0x4] sm:$0xf]
    %v338 = vld [vmem:[%s335 + $0x8] sm:$0xf]
    %v339 = vld [vmem:[%s335 + $0xc] sm:$0xf]
    %v340 = vld [vmem:[%s335 + $0x10] sm:$0xf]
    %v341 = vld [vmem:[%s335 + $0x14] sm:$0xf]
    %v342 = vld [vmem:[%s335 + $0x18] sm:$0xf]
    %v343 = vld [vmem:[%s335 + $0x1c] sm:$0xf]
    %s344 = scalar_lea.vmem %s1, 64
    %v345 = vld [vmem:[%s344] sm:$0xff]
    %v346 = vld [vmem:[%s344 + $0x8] sm:$0xff]
    %v347 = vld [vmem:[%s344 + $0x10] sm:$0xff]
    %v348 = vld [vmem:[%s344 + $0x18] sm:$0xff]
    %v349 = vld [vmem:[%s344 + $0x20] sm:$0xff]
    %v350 = vld [vmem:[%s344 + $0x28] sm:$0xff]
    %v351 = vld [vmem:[%s344 + $0x30] sm:$0xff]
    %v352 = vld [vmem:[%s344 + $0x38] sm:$0xff]
    %v353 = vpack.c.bf16 %v346, %v345
    %v354 = vpack.c.bf16 %v348, %v347
    %v355 = vpack.c.bf16 %v350, %v349
    %v356 = vpack.c.bf16 %v352, %v351
    %v358 = vsel %vm34, %v353, 1065369472
    %v361 = vsel %vm34, %v354, 1065369472
    %v364 = vsel %vm34, %v355, 1065369472
    %v367 = vsel %vm34, %v356, 1065369472
    %v377 = vunpack.c.l.b16 %v336
    %v378 = vunpack.c.l.b16 %v337
    %v379 = vunpack.c.l.b16 %v338
    %v380 = vunpack.c.l.b16 %v339
    %v381 = vunpack.c.l.b16 %v340
    %v382 = vunpack.c.l.b16 %v341
    %v383 = vunpack.c.l.b16 %v342
    %v384 = vunpack.c.l.b16 %v343
    %v385 = vpack.c.b16 %v378, %v377
    %v386 = vpack.c.b16 %v380, %v379
    %v387 = vpack.c.b16 %v382, %v381
    %v388 = vpack.c.b16 %v384, %v383
    %v390 = vsel %vm68, %v385, 0
    %v393 = vsel %vm68, %v386, 0
    %v396 = vsel %vm68, %v387, 0
    %v399 = vsel %vm68, %v388, 0
    %401 = vmatprep.subr.bf16.mxu0 0
    %402 = vmatpush1.bf16.msra.mxu0 %v358
    %403 = vmatprep.subr.bf16.mxu0 0
    %404 = vmatpush1.bf16.msra.mxu0 %v361
    %405 = vmatprep.subr.bf16.mxu0 0
    %406 = vmatpush1.bf16.msra.mxu0 %v364
    %407 = vmatprep.subr.bf16.mxu0 0
    %408 = vmatpush1.bf16.msra.mxu0 %v367
    %409 = vmatprep.subr.bf16.mxu0 0
    %410 = vmatpush1.bf16.msra.mxu0 0
    %411 = vmatprep.subr.bf16.mxu0 0
    %412 = vmatpush1.bf16.msra.mxu0 0
    %413 = vmatprep.subr.bf16.mxu0 0
    %414 = vmatpush1.bf16.msra.mxu0 0
    %415 = vmatprep.subr.bf16.mxu0 0
    %416 = vmatpush1.bf16.msra.mxu0 0
    %417 = vmatprep.subr.bf16.mxu0 0
    %418 = vmatpush1.bf16.msra.mxu0 0
    %419 = vmatprep.subr.bf16.mxu0 0
    %420 = vmatpush1.bf16.msra.mxu0 0
    %421 = vmatprep.subr.bf16.mxu0 0
    %422 = vmatpush1.bf16.msra.mxu0 0
    %423 = vmatprep.subr.bf16.mxu0 0
    %424 = vmatpush1.bf16.msra.mxu0 0
    %425 = vmatprep.subr.bf16.mxu0 0
    %426 = vmatpush1.bf16.msra.mxu0 0
    %427 = vmatprep.subr.bf16.mxu0 0
    %428 = vmatpush1.bf16.msra.mxu0 0
    %429 = vmatprep.subr.bf16.mxu0 0
    %430 = vmatpush1.bf16.msra.mxu0 0
    %431 = vmatprep.subr.bf16.mxu0 0
    %432 = vmatpush1.bf16.msra.mxu0 0
    %433 = vmatprep.mubr.bf16.mxu0 0
    %434 = vmatmul.mubr.bf16.gmra.mrb[0].mxu0 %v390
    %v435 = vpop.f32.mrb[0].mxu0
    %v436 = vadd.f32 0.0, %v435
    %v437 = vpop.f32.mrb[0].mxu0
    %v438 = vpop.f32.mrb[0].mxu0
    %v439 = vadd.f32 0.0, %v438
    %v440 = vpop.f32.mrb[0].mxu0
    %441 = vmatprep.mubr.bf16.mxu0 0
    %442 = vmatmul.mubr.bf16.gmra.mrb[0].mxu0 %v393
    %v443 = vpop.f32.mrb[0].mxu0
    %v444 = vadd.f32 0.0, %v443
    %v445 = vpop.f32.mrb[0].mxu0
    %v446 = vpop.f32.mrb[0].mxu0
    %v447 = vadd.f32 0.0, %v446
    %v448 = vpop.f32.mrb[0].mxu0
    %449 = vmatprep.mubr.bf16.mxu0 0
    %450 = vmatmul.mubr.bf16.gmra.mrb[0].mxu0 %v396
    %v451 = vpop.f32.mrb[0].mxu0
    %v452 = vadd.f32 0.0, %v451
    %v453 = vpop.f32.mrb[0].mxu0
    %v454 = vpop.f32.mrb[0].mxu0
    %v455 = vadd.f32 0.0, %v454
    %v456 = vpop.f32.mrb[0].mxu0
    %457 = vmatprep.mubr.bf16.mxu0 0
    %458 = vmatmul.mubr.bf16.gmra.mrb[0].mxu0 %v399
    %v459 = vpop.f32.mrb[0].mxu0
    %v460 = vadd.f32 0.0, %v459
    %v461 = vpop.f32.mrb[0].mxu0
    %v462 = vpop.f32.mrb[0].mxu0
    %v463 = vadd.f32 0.0, %v462
    %v464 = vpop.f32.mrb[0].mxu0
    %465 = vdwg.mxu0
    %vm466 = vcmp.gt.f32.partialorder %v436, 0.0
    %vm467 = vcmp.gt.f32.partialorder %v439, 0.0
    %vm468 = vcmp.gt.f32.partialorder %v444, 0.0
    %vm469 = vcmp.gt.f32.partialorder %v447, 0.0
    %vm470 = vcmp.gt.f32.partialorder %v452, 0.0
    %vm471 = vcmp.gt.f32.partialorder %v455, 0.0
    %vm472 = vcmp.gt.f32.partialorder %v460, 0.0
    %vm473 = vcmp.gt.f32.partialorder %v463, 0.0
    %v474 = vrcp.pop %v436
    %v475 = vrcp.pop %v439
    %v476 = vrcp.pop %v444
    %v477 = vrcp.pop %v447
    %v478 = vrcp.pop %v452
    %v479 = vrcp.pop %v455
    %v480 = vrcp.pop %v460
    %v481 = vrcp.pop %v463
    %v482 = vsel %vm466, %v474, 0.0
    %v483 = vsel %vm467, %v475, 0.0
    %v484 = vsel %vm468, %v476, 0.0
    %v485 = vsel %vm469, %v477, 0.0
    %v486 = vsel %vm470, %v478, 0.0
    %v487 = vsel %vm471, %v479, 0.0
    %v488 = vsel %vm472, %v480, 0.0
    %v489 = vsel %vm473, %v481, 0.0
    %491 = vset.pattern.permute.xlu0 32
    %492 = vperm.xlu0 %491, %v482
    %v493 = vpop.permute.xlu0 %492
    %496 = vset.pattern.permute.xlu0 32
    %497 = vperm.xlu0 %496, %v483
    %v498 = vpop.permute.xlu0 %497
    %501 = vset.pattern.permute.xlu0 32
    %502 = vperm.xlu0 %501, %v484
    %v503 = vpop.permute.xlu0 %502
    %506 = vset.pattern.permute.xlu0 32
    %507 = vperm.xlu0 %506, %v485
    %v508 = vpop.permute.xlu0 %507
    %511 = vset.pattern.permute.xlu0 32
    %512 = vperm.xlu0 %511, %v486
    %v513 = vpop.permute.xlu0 %512
    %516 = vset.pattern.permute.xlu0 32
    %517 = vperm.xlu0 %516, %v487
    %v518 = vpop.permute.xlu0 %517
    %521 = vset.pattern.permute.xlu0 32
    %522 = vperm.xlu0 %521, %v488
    %v523 = vpop.permute.xlu0 %522
    %526 = vset.pattern.permute.xlu0 32
    %527 = vperm.xlu0 %526, %v489
    %v528 = vpop.permute.xlu0 %527
    %v530 = vmul.f32 %v493, %v436
    %v531 = vmul.f32 %v498, %v439
    %v532 = vmul.f32 %v503, %v444
    %v533 = vmul.f32 %v508, %v447
    %v534 = vmul.f32 %v513, %v452
    %v535 = vmul.f32 %v518, %v455
    %v536 = vmul.f32 %v523, %v460
    %v537 = vmul.f32 %v528, %v463
    %v538 = vpack.c.bf16 %v531, %v530
    %v539 = vpack.c.bf16 %v533, %v532
    %v540 = vpack.c.bf16 %v535, %v534
    %v541 = vpack.c.bf16 %v537, %v536
    %542 = vmatprep.subr.bf16.mxu0 0
    %543 = vmatpush1.bf16.msra.mxu0 %v538
    %544 = vmatprep.subr.bf16.mxu0 0
    %545 = vmatpush1.bf16.msra.mxu0 %v539
    %546 = vmatprep.subr.bf16.mxu0 0
    %547 = vmatpush1.bf16.msra.mxu0 %v540
    %548 = vmatprep.subr.bf16.mxu0 0
    %549 = vmatpush1.bf16.msra.mxu0 %v541
    %550 = vmatprep.subr.bf16.mxu0 0
    %551 = vmatpush1.bf16.msra.mxu0 0
    %552 = vmatprep.subr.bf16.mxu0 0
    %553 = vmatpush1.bf16.msra.mxu0 0
    %554 = vmatprep.subr.bf16.mxu0 0
    %555 = vmatpush1.bf16.msra.mxu0 0
    %556 = vmatprep.subr.bf16.mxu0 0
    %557 = vmatpush1.bf16.msra.mxu0 0
    %558 = vmatprep.subr.bf16.mxu0 0
    %559 = vmatpush1.bf16.msra.mxu0 0
    %560 = vmatprep.subr.bf16.mxu0 0
    %561 = vmatpush1.bf16.msra.mxu0 0
    %562 = vmatprep.subr.bf16.mxu0 0
    %563 = vmatpush1.bf16.msra.mxu0 0
    %564 = vmatprep.subr.bf16.mxu0 0
    %565 = vmatpush1.bf16.msra.mxu0 0
    %566 = vmatprep.subr.bf16.mxu0 0
    %567 = vmatpush1.bf16.msra.mxu0 0
    %568 = vmatprep.subr.bf16.mxu0 0
    %569 = vmatpush1.bf16.msra.mxu0 0
    %570 = vmatprep.subr.bf16.mxu0 0
    %571 = vmatpush1.bf16.msra.mxu0 0
    %572 = vmatprep.subr.bf16.mxu0 0
    %573 = vmatpush1.bf16.msra.mxu0 0
    %574 = vmatprep.mubr.bf16.mxu0 0
    %575 = vmatmul.mubr.bf16.gmra.mrb[0].mxu0 %v390
    %v576 = vpop.f32.mrb[0].mxu0
    %v577 = vadd.f32 0.0, %v576
    %v578 = vpop.f32.mrb[0].mxu0
    %v579 = vpop.f32.mrb[0].mxu0
    %v580 = vadd.f32 0.0, %v579
    %v581 = vpop.f32.mrb[0].mxu0
    %582 = vmatprep.mubr.bf16.mxu0 0
    %583 = vmatmul.mubr.bf16.gmra.mrb[0].mxu0 %v393
    %v584 = vpop.f32.mrb[0].mxu0
    %v585 = vadd.f32 0.0, %v584
    %v586 = vpop.f32.mrb[0].mxu0
    %v587 = vpop.f32.mrb[0].mxu0
    %v588 = vadd.f32 0.0, %v587
    %v589 = vpop.f32.mrb[0].mxu0
    %590 = vmatprep.mubr.bf16.mxu0 0
    %591 = vmatmul.mubr.bf16.gmra.mrb[0].mxu0 %v396
    %v592 = vpop.f32.mrb[0].mxu0
    %v593 = vadd.f32 0.0, %v592
    %v594 = vpop.f32.mrb[0].mxu0
    %v595 = vpop.f32.mrb[0].mxu0
    %v596 = vadd.f32 0.0, %v595
    %v597 = vpop.f32.mrb[0].mxu0
    %598 = vmatprep.mubr.bf16.mxu0 0
    %599 = vmatmul.mubr.bf16.gmra.mrb[0].mxu0 %v399
    %v600 = vpop.f32.mrb[0].mxu0
    %v601 = vadd.f32 0.0, %v600
    %v602 = vpop.f32.mrb[0].mxu0
    %v603 = vpop.f32.mrb[0].mxu0
    %v604 = vadd.f32 0.0, %v603
    %v605 = vpop.f32.mrb[0].mxu0
    %606 = vdwg.mxu0
    %v607 = vmul.f32 %v493, %v577
    %v608 = vmul.f32 %v498, %v580
    %v609 = vmul.f32 %v503, %v585
    %v610 = vmul.f32 %v508, %v588
    %v611 = vmul.f32 %v513, %v593
    %v612 = vmul.f32 %v518, %v596
    %v613 = vmul.f32 %v523, %v601
    %v614 = vmul.f32 %v528, %v604
    %v615 = vmul.f32 %v345, 2.5
    %v616 = vmul.f32 %v346, 2.5
    %v617 = vmul.f32 %v347, 2.5
    %v618 = vmul.f32 %v348, 2.5
    %v619 = vmul.f32 %v349, 2.5
    %v620 = vmul.f32 %v350, 2.5
    %v621 = vmul.f32 %v351, 2.5
    %v622 = vmul.f32 %v352, 2.5
    %v623 = vmul.f32 %v530, 2.0
    %v624 = vmul.f32 %v531, 2.0
    %v625 = vmul.f32 %v532, 2.0
    %v626 = vmul.f32 %v533, 2.0
    %v627 = vmul.f32 %v534, 2.0
    %v628 = vmul.f32 %v535, 2.0
    %v629 = vmul.f32 %v536, 2.0
    %v630 = vmul.f32 %v537, 2.0
    %v631 = vadd.f32 %v615, %v623
    %v632 = vadd.f32 %v616, %v624
    %v633 = vadd.f32 %v617, %v625
    %v634 = vadd.f32 %v618, %v626
    %v635 = vadd.f32 %v619, %v627
    %v636 = vadd.f32 %v620, %v628
    %v637 = vadd.f32 %v621, %v629
    %v638 = vadd.f32 %v622, %v630
    %v639 = vmul.f32 %v607, 0.5
    %v640 = vmul.f32 %v608, 0.5
    %v641 = vmul.f32 %v609, 0.5
    %v642 = vmul.f32 %v610, 0.5
    %v643 = vmul.f32 %v611, 0.5
    %v644 = vmul.f32 %v612, 0.5
    %v645 = vmul.f32 %v613, 0.5
    %v646 = vmul.f32 %v614, 0.5
    %v647 = vadd.f32 %v631, %v639
    %v648 = vadd.f32 %v632, %v640
    %v649 = vadd.f32 %v633, %v641
    %v650 = vadd.f32 %v634, %v642
    %v651 = vadd.f32 %v635, %v643
    %v652 = vadd.f32 %v636, %v644
    %v653 = vadd.f32 %v637, %v645
    %v654 = vadd.f32 %v638, %v646
    %s655 = scalar_lea.vmem %s0, 64
    %v656 = vld [vmem:[%s655] sm:$0xf]
    %v657 = vld [vmem:[%s655 + $0x4] sm:$0xf]
    %v658 = vld [vmem:[%s655 + $0x8] sm:$0xf]
    %v659 = vld [vmem:[%s655 + $0xc] sm:$0xf]
    %v660 = vld [vmem:[%s655 + $0x10] sm:$0xf]
    %v661 = vld [vmem:[%s655 + $0x14] sm:$0xf]
    %v662 = vld [vmem:[%s655 + $0x18] sm:$0xf]
    %v663 = vld [vmem:[%s655 + $0x1c] sm:$0xf]
    %s664 = scalar_lea.vmem %s1, 128
    %v665 = vld [vmem:[%s664] sm:$0xff]
    %v666 = vld [vmem:[%s664 + $0x8] sm:$0xff]
    %v667 = vld [vmem:[%s664 + $0x10] sm:$0xff]
    %v668 = vld [vmem:[%s664 + $0x18] sm:$0xff]
    %v669 = vld [vmem:[%s664 + $0x20] sm:$0xff]
    %v670 = vld [vmem:[%s664 + $0x28] sm:$0xff]
    %v671 = vld [vmem:[%s664 + $0x30] sm:$0xff]
    %v672 = vld [vmem:[%s664 + $0x38] sm:$0xff]
    %v673 = vpack.c.bf16 %v666, %v665
    %v674 = vpack.c.bf16 %v668, %v667
    %v675 = vpack.c.bf16 %v670, %v669
    %v676 = vpack.c.bf16 %v672, %v671
    %v678 = vsel %vm34, %v673, 1065369472
    %v681 = vsel %vm34, %v674, 1065369472
    %v684 = vsel %vm34, %v675, 1065369472
    %v687 = vsel %vm34, %v676, 1065369472
    %v697 = vunpack.c.l.b16 %v656
    %v698 = vunpack.c.l.b16 %v657
    %v699 = vunpack.c.l.b16 %v658
    %v700 = vunpack.c.l.b16 %v659
    %v701 = vunpack.c.l.b16 %v660
    %v702 = vunpack.c.l.b16 %v661
    %v703 = vunpack.c.l.b16 %v662
    %v704 = vunpack.c.l.b16 %v663
    %v705 = vpack.c.b16 %v698, %v697
    %v706 = vpack.c.b16 %v700, %v699
    %v707 = vpack.c.b16 %v702, %v701
    %v708 = vpack.c.b16 %v704, %v703
    %v710 = vsel %vm68, %v705, 0
    %v713 = vsel %vm68, %v706, 0
    %v716 = vsel %vm68, %v707, 0
    %v719 = vsel %vm68, %v708, 0
    %721 = vmatprep.subr.bf16.mxu0 0
    %722 = vmatpush1.bf16.msra.mxu0 %v678
    %723 = vmatprep.subr.bf16.mxu0 0
    %724 = vmatpush1.bf16.msra.mxu0 %v681
    %725 = vmatprep.subr.bf16.mxu0 0
    %726 = vmatpush1.bf16.msra.mxu0 %v684
    %727 = vmatprep.subr.bf16.mxu0 0
    %728 = vmatpush1.bf16.msra.mxu0 %v687
    %729 = vmatprep.subr.bf16.mxu0 0
    %730 = vmatpush1.bf16.msra.mxu0 0
    %731 = vmatprep.subr.bf16.mxu0 0
    %732 = vmatpush1.bf16.msra.mxu0 0
    %733 = vmatprep.subr.bf16.mxu0 0
    %734 = vmatpush1.bf16.msra.mxu0 0
    %735 = vmatprep.subr.bf16.mxu0 0
    %736 = vmatpush1.bf16.msra.mxu0 0
    %737 = vmatprep.subr.bf16.mxu0 0
    %738 = vmatpush1.bf16.msra.mxu0 0
    %739 = vmatprep.subr.bf16.mxu0 0
    %740 = vmatpush1.bf16.msra.mxu0 0
    %741 = vmatprep.subr.bf16.mxu0 0
    %742 = vmatpush1.bf16.msra.mxu0 0
    %743 = vmatprep.subr.bf16.mxu0 0
    %744 = vmatpush1.bf16.msra.mxu0 0
    %745 = vmatprep.subr.bf16.mxu0 0
    %746 = vmatpush1.bf16.msra.mxu0 0
    %747 = vmatprep.subr.bf16.mxu0 0
    %748 = vmatpush1.bf16.msra.mxu0 0
    %749 = vmatprep.subr.bf16.mxu0 0
    %750 = vmatpush1.bf16.msra.mxu0 0
    %751 = vmatprep.subr.bf16.mxu0 0
    %752 = vmatpush1.bf16.msra.mxu0 0
    %753 = vmatprep.mubr.bf16.mxu0 0
    %754 = vmatmul.mubr.bf16.gmra.mrb[0].mxu0 %v710
    %v755 = vpop.f32.mrb[0].mxu0
    %v756 = vadd.f32 0.0, %v755
    %v757 = vpop.f32.mrb[0].mxu0
    %v758 = vpop.f32.mrb[0].mxu0
    %v759 = vadd.f32 0.0, %v758
    %v760 = vpop.f32.mrb[0].mxu0
    %761 = vmatprep.mubr.bf16.mxu0 0
    %762 = vmatmul.mubr.bf16.gmra.mrb[0].mxu0 %v713
    %v763 = vpop.f32.mrb[0].mxu0
    %v764 = vadd.f32 0.0, %v763
    %v765 = vpop.f32.mrb[0].mxu0
    %v766 = vpop.f32.mrb[0].mxu0
    %v767 = vadd.f32 0.0, %v766
    %v768 = vpop.f32.mrb[0].mxu0
    %769 = vmatprep.mubr.bf16.mxu0 0
    %770 = vmatmul.mubr.bf16.gmra.mrb[0].mxu0 %v716
    %v771 = vpop.f32.mrb[0].mxu0
    %v772 = vadd.f32 0.0, %v771
    %v773 = vpop.f32.mrb[0].mxu0
    %v774 = vpop.f32.mrb[0].mxu0
    %v775 = vadd.f32 0.0, %v774
    %v776 = vpop.f32.mrb[0].mxu0
    %777 = vmatprep.mubr.bf16.mxu0 0
    %778 = vmatmul.mubr.bf16.gmra.mrb[0].mxu0 %v719
    %v779 = vpop.f32.mrb[0].mxu0
    %v780 = vadd.f32 0.0, %v779
    %v781 = vpop.f32.mrb[0].mxu0
    %v782 = vpop.f32.mrb[0].mxu0
    %v783 = vadd.f32 0.0, %v782
    %v784 = vpop.f32.mrb[0].mxu0
    %785 = vdwg.mxu0
    %vm786 = vcmp.gt.f32.partialorder %v756, 0.0
    %vm787 = vcmp.gt.f32.partialorder %v759, 0.0
    %vm788 = vcmp.gt.f32.partialorder %v764, 0.0
    %vm789 = vcmp.gt.f32.partialorder %v767, 0.0
    %vm790 = vcmp.gt.f32.partialorder %v772, 0.0
    %vm791 = vcmp.gt.f32.partialorder %v775, 0.0
    %vm792 = vcmp.gt.f32.partialorder %v780, 0.0
    %vm793 = vcmp.gt.f32.partialorder %v783, 0.0
    %v794 = vrcp.pop %v756
    %v795 = vrcp.pop %v759
    %v796 = vrcp.pop %v764
    %v797 = vrcp.pop %v767
    %v798 = vrcp.pop %v772
    %v799 = vrcp.pop %v775
    %v800 = vrcp.pop %v780
    %v801 = vrcp.pop %v783
    %v802 = vsel %vm786, %v794, 0.0
    %v803 = vsel %vm787, %v795, 0.0
    %v804 = vsel %vm788, %v796, 0.0
    %v805 = vsel %vm789, %v797, 0.0
    %v806 = vsel %vm790, %v798, 0.0
    %v807 = vsel %vm791, %v799, 0.0
    %v808 = vsel %vm792, %v800, 0.0
    %v809 = vsel %vm793, %v801, 0.0
    %811 = vset.pattern.permute.xlu0 32
    %812 = vperm.xlu0 %811, %v802
    %v813 = vpop.permute.xlu0 %812
    %816 = vset.pattern.permute.xlu0 32
    %817 = vperm.xlu0 %816, %v803
    %v818 = vpop.permute.xlu0 %817
    %821 = vset.pattern.permute.xlu0 32
    %822 = vperm.xlu0 %821, %v804
    %v823 = vpop.permute.xlu0 %822
    %826 = vset.pattern.permute.xlu0 32
    %827 = vperm.xlu0 %826, %v805
    %v828 = vpop.permute.xlu0 %827
    %831 = vset.pattern.permute.xlu0 32
    %832 = vperm.xlu0 %831, %v806
    %v833 = vpop.permute.xlu0 %832
    %836 = vset.pattern.permute.xlu0 32
    %837 = vperm.xlu0 %836, %v807
    %v838 = vpop.permute.xlu0 %837
    %841 = vset.pattern.permute.xlu0 32
    %842 = vperm.xlu0 %841, %v808
    %v843 = vpop.permute.xlu0 %842
    %846 = vset.pattern.permute.xlu0 32
    %847 = vperm.xlu0 %846, %v809
    %v848 = vpop.permute.xlu0 %847
    %v850 = vmul.f32 %v813, %v756
    %v851 = vmul.f32 %v818, %v759
    %v852 = vmul.f32 %v823, %v764
    %v853 = vmul.f32 %v828, %v767
    %v854 = vmul.f32 %v833, %v772
    %v855 = vmul.f32 %v838, %v775
    %v856 = vmul.f32 %v843, %v780
    %v857 = vmul.f32 %v848, %v783
    %v858 = vpack.c.bf16 %v851, %v850
    %v859 = vpack.c.bf16 %v853, %v852
    %v860 = vpack.c.bf16 %v855, %v854
    %v861 = vpack.c.bf16 %v857, %v856
    %862 = vmatprep.subr.bf16.mxu0 0
    %863 = vmatpush1.bf16.msra.mxu0 %v858
    %864 = vmatprep.subr.bf16.mxu0 0
    %865 = vmatpush1.bf16.msra.mxu0 %v859
    %866 = vmatprep.subr.bf16.mxu0 0
    %867 = vmatpush1.bf16.msra.mxu0 %v860
    %868 = vmatprep.subr.bf16.mxu0 0
    %869 = vmatpush1.bf16.msra.mxu0 %v861
    %870 = vmatprep.subr.bf16.mxu0 0
    %871 = vmatpush1.bf16.msra.mxu0 0
    %872 = vmatprep.subr.bf16.mxu0 0
    %873 = vmatpush1.bf16.msra.mxu0 0
    %874 = vmatprep.subr.bf16.mxu0 0
    %875 = vmatpush1.bf16.msra.mxu0 0
    %876 = vmatprep.subr.bf16.mxu0 0
    %877 = vmatpush1.bf16.msra.mxu0 0
    %878 = vmatprep.subr.bf16.mxu0 0
    %879 = vmatpush1.bf16.msra.mxu0 0
    %880 = vmatprep.subr.bf16.mxu0 0
    %881 = vmatpush1.bf16.msra.mxu0 0
    %882 = vmatprep.subr.bf16.mxu0 0
    %883 = vmatpush1.bf16.msra.mxu0 0
    %884 = vmatprep.subr.bf16.mxu0 0
    %885 = vmatpush1.bf16.msra.mxu0 0
    %886 = vmatprep.subr.bf16.mxu0 0
    %887 = vmatpush1.bf16.msra.mxu0 0
    %888 = vmatprep.subr.bf16.mxu0 0
    %889 = vmatpush1.bf16.msra.mxu0 0
    %890 = vmatprep.subr.bf16.mxu0 0
    %891 = vmatpush1.bf16.msra.mxu0 0
    %892 = vmatprep.subr.bf16.mxu0 0
    %893 = vmatpush1.bf16.msra.mxu0 0
    %894 = vmatprep.mubr.bf16.mxu0 0
    %895 = vmatmul.mubr.bf16.gmra.mrb[0].mxu0 %v710
    %v896 = vpop.f32.mrb[0].mxu0
    %v897 = vadd.f32 0.0, %v896
    %v898 = vpop.f32.mrb[0].mxu0
    %v899 = vpop.f32.mrb[0].mxu0
    %v900 = vadd.f32 0.0, %v899
    %v901 = vpop.f32.mrb[0].mxu0
    %902 = vmatprep.mubr.bf16.mxu0 0
    %903 = vmatmul.mubr.bf16.gmra.mrb[0].mxu0 %v713
    %v904 = vpop.f32.mrb[0].mxu0
    %v905 = vadd.f32 0.0, %v904
    %v906 = vpop.f32.mrb[0].mxu0
    %v907 = vpop.f32.mrb[0].mxu0
    %v908 = vadd.f32 0.0, %v907
    %v909 = vpop.f32.mrb[0].mxu0
    %910 = vmatprep.mubr.bf16.mxu0 0
    %911 = vmatmul.mubr.bf16.gmra.mrb[0].mxu0 %v716
    %v912 = vpop.f32.mrb[0].mxu0
    %v913 = vadd.f32 0.0, %v912
    %v914 = vpop.f32.mrb[0].mxu0
    %v915 = vpop.f32.mrb[0].mxu0
    %v916 = vadd.f32 0.0, %v915
    %v917 = vpop.f32.mrb[0].mxu0
    %918 = vmatprep.mubr.bf16.mxu0 0
    %919 = vmatmul.mubr.bf16.gmra.mrb[0].mxu0 %v719
    %v920 = vpop.f32.mrb[0].mxu0
    %v921 = vadd.f32 0.0, %v920
    %v922 = vpop.f32.mrb[0].mxu0
    %v923 = vpop.f32.mrb[0].mxu0
    %v924 = vadd.f32 0.0, %v923
    %v925 = vpop.f32.mrb[0].mxu0
    %926 = vdwg.mxu0
    %v927 = vmul.f32 %v813, %v897
    %v928 = vmul.f32 %v818, %v900
    %v929 = vmul.f32 %v823, %v905
    %v930 = vmul.f32 %v828, %v908
    %v931 = vmul.f32 %v833, %v913
    %v932 = vmul.f32 %v838, %v916
    %v933 = vmul.f32 %v843, %v921
    %v934 = vmul.f32 %v848, %v924
    %v935 = vmul.f32 %v665, 2.5
    %v936 = vmul.f32 %v666, 2.5
    %v937 = vmul.f32 %v667, 2.5
    %v938 = vmul.f32 %v668, 2.5
    %v939 = vmul.f32 %v669, 2.5
    %v940 = vmul.f32 %v670, 2.5
    %v941 = vmul.f32 %v671, 2.5
    %v942 = vmul.f32 %v672, 2.5
    %v943 = vmul.f32 %v850, 2.0
    %v944 = vmul.f32 %v851, 2.0
    %v945 = vmul.f32 %v852, 2.0
    %v946 = vmul.f32 %v853, 2.0
    %v947 = vmul.f32 %v854, 2.0
    %v948 = vmul.f32 %v855, 2.0
    %v949 = vmul.f32 %v856, 2.0
    %v950 = vmul.f32 %v857, 2.0
    %v951 = vadd.f32 %v935, %v943
    %v952 = vadd.f32 %v936, %v944
    %v953 = vadd.f32 %v937, %v945
    %v954 = vadd.f32 %v938, %v946
    %v955 = vadd.f32 %v939, %v947
    %v956 = vadd.f32 %v940, %v948
    %v957 = vadd.f32 %v941, %v949
    %v958 = vadd.f32 %v942, %v950
    %v959 = vmul.f32 %v927, 0.5
    %v960 = vmul.f32 %v928, 0.5
    %v961 = vmul.f32 %v929, 0.5
    %v962 = vmul.f32 %v930, 0.5
    %v963 = vmul.f32 %v931, 0.5
    %v964 = vmul.f32 %v932, 0.5
    %v965 = vmul.f32 %v933, 0.5
    %v966 = vmul.f32 %v934, 0.5
    %v967 = vadd.f32 %v951, %v959
    %v968 = vadd.f32 %v952, %v960
    %v969 = vadd.f32 %v953, %v961
    %v970 = vadd.f32 %v954, %v962
    %v971 = vadd.f32 %v955, %v963
    %v972 = vadd.f32 %v956, %v964
    %v973 = vadd.f32 %v957, %v965
    %v974 = vadd.f32 %v958, %v966
    %s975 = scalar_lea.vmem %s0, 96
    %v976 = vld [vmem:[%s975] sm:$0xf]
    %v977 = vld [vmem:[%s975 + $0x4] sm:$0xf]
    %v978 = vld [vmem:[%s975 + $0x8] sm:$0xf]
    %v979 = vld [vmem:[%s975 + $0xc] sm:$0xf]
    %v980 = vld [vmem:[%s975 + $0x10] sm:$0xf]
    %v981 = vld [vmem:[%s975 + $0x14] sm:$0xf]
    %v982 = vld [vmem:[%s975 + $0x18] sm:$0xf]
    %v983 = vld [vmem:[%s975 + $0x1c] sm:$0xf]
    %s984 = scalar_lea.vmem %s1, 192
    %v985 = vld [vmem:[%s984] sm:$0xff]
    %v986 = vld [vmem:[%s984 + $0x8] sm:$0xff]
    %v987 = vld [vmem:[%s984 + $0x10] sm:$0xff]
    %v988 = vld [vmem:[%s984 + $0x18] sm:$0xff]
    %v989 = vld [vmem:[%s984 + $0x20] sm:$0xff]
    %v990 = vld [vmem:[%s984 + $0x28] sm:$0xff]
    %v991 = vld [vmem:[%s984 + $0x30] sm:$0xff]
    %v992 = vld [vmem:[%s984 + $0x38] sm:$0xff]
    %v993 = vpack.c.bf16 %v986, %v985
    %v994 = vpack.c.bf16 %v988, %v987
    %v995 = vpack.c.bf16 %v990, %v989
    %v996 = vpack.c.bf16 %v992, %v991
    %v998 = vsel %vm34, %v993, 1065369472
    %v1001 = vsel %vm34, %v994, 1065369472
    %v1004 = vsel %vm34, %v995, 1065369472
    %v1007 = vsel %vm34, %v996, 1065369472
    %v1017 = vunpack.c.l.b16 %v976
    %v1018 = vunpack.c.l.b16 %v977
    %v1019 = vunpack.c.l.b16 %v978
    %v1020 = vunpack.c.l.b16 %v979
    %v1021 = vunpack.c.l.b16 %v980
    %v1022 = vunpack.c.l.b16 %v981
    %v1023 = vunpack.c.l.b16 %v982
    %v1024 = vunpack.c.l.b16 %v983
    %v1025 = vpack.c.b16 %v1018, %v1017
    %v1026 = vpack.c.b16 %v1020, %v1019
    %v1027 = vpack.c.b16 %v1022, %v1021
    %v1028 = vpack.c.b16 %v1024, %v1023
    %v1030 = vsel %vm68, %v1025, 0
    %v1033 = vsel %vm68, %v1026, 0
    %v1036 = vsel %vm68, %v1027, 0
    %v1039 = vsel %vm68, %v1028, 0
    %1041 = vmatprep.subr.bf16.mxu0 0
    %1042 = vmatpush1.bf16.msra.mxu0 %v998
    %1043 = vmatprep.subr.bf16.mxu0 0
    %1044 = vmatpush1.bf16.msra.mxu0 %v1001
    %1045 = vmatprep.subr.bf16.mxu0 0
    %1046 = vmatpush1.bf16.msra.mxu0 %v1004
    %1047 = vmatprep.subr.bf16.mxu0 0
    %1048 = vmatpush1.bf16.msra.mxu0 %v1007
    %1049 = vmatprep.subr.bf16.mxu0 0
    %1050 = vmatpush1.bf16.msra.mxu0 0
    %1051 = vmatprep.subr.bf16.mxu0 0
    %1052 = vmatpush1.bf16.msra.mxu0 0
    %1053 = vmatprep.subr.bf16.mxu0 0
    %1054 = vmatpush1.bf16.msra.mxu0 0
    %1055 = vmatprep.subr.bf16.mxu0 0
    %1056 = vmatpush1.bf16.msra.mxu0 0
    %1057 = vmatprep.subr.bf16.mxu0 0
    %1058 = vmatpush1.bf16.msra.mxu0 0
    %1059 = vmatprep.subr.bf16.mxu0 0
    %1060 = vmatpush1.bf16.msra.mxu0 0
    %1061 = vmatprep.subr.bf16.mxu0 0
    %1062 = vmatpush1.bf16.msra.mxu0 0
    %1063 = vmatprep.subr.bf16.mxu0 0
    %1064 = vmatpush1.bf16.msra.mxu0 0
    %1065 = vmatprep.subr.bf16.mxu0 0
    %1066 = vmatpush1.bf16.msra.mxu0 0
    %1067 = vmatprep.subr.bf16.mxu0 0
    %1068 = vmatpush1.bf16.msra.mxu0 0
    %1069 = vmatprep.subr.bf16.mxu0 0
    %1070 = vmatpush1.bf16.msra.mxu0 0
    %1071 = vmatprep.subr.bf16.mxu0 0
    %1072 = vmatpush1.bf16.msra.mxu0 0
    %1073 = vmatprep.mubr.bf16.mxu0 0
    %1074 = vmatmul.mubr.bf16.gmra.mrb[0].mxu0 %v1030
    %v1075 = vpop.f32.mrb[0].mxu0
    %v1076 = vadd.f32 0.0, %v1075
    %v1077 = vpop.f32.mrb[0].mxu0
    %v1078 = vpop.f32.mrb[0].mxu0
    %v1079 = vadd.f32 0.0, %v1078
    %v1080 = vpop.f32.mrb[0].mxu0
    %1081 = vmatprep.mubr.bf16.mxu0 0
    %1082 = vmatmul.mubr.bf16.gmra.mrb[0].mxu0 %v1033
    %v1083 = vpop.f32.mrb[0].mxu0
    %v1084 = vadd.f32 0.0, %v1083
    %v1085 = vpop.f32.mrb[0].mxu0
    %v1086 = vpop.f32.mrb[0].mxu0
    %v1087 = vadd.f32 0.0, %v1086
    %v1088 = vpop.f32.mrb[0].mxu0
    %1089 = vmatprep.mubr.bf16.mxu0 0
    %1090 = vmatmul.mubr.bf16.gmra.mrb[0].mxu0 %v1036
    %v1091 = vpop.f32.mrb[0].mxu0
    %v1092 = vadd.f32 0.0, %v1091
    %v1093 = vpop.f32.mrb[0].mxu0
    %v1094 = vpop.f32.mrb[0].mxu0
    %v1095 = vadd.f32 0.0, %v1094
    %v1096 = vpop.f32.mrb[0].mxu0
    %1097 = vmatprep.mubr.bf16.mxu0 0
    %1098 = vmatmul.mubr.bf16.gmra.mrb[0].mxu0 %v1039
    %v1099 = vpop.f32.mrb[0].mxu0
    %v1100 = vadd.f32 0.0, %v1099
    %v1101 = vpop.f32.mrb[0].mxu0
    %v1102 = vpop.f32.mrb[0].mxu0
    %v1103 = vadd.f32 0.0, %v1102
    %v1104 = vpop.f32.mrb[0].mxu0
    %1105 = vdwg.mxu0
    %vm1106 = vcmp.gt.f32.partialorder %v1076, 0.0
    %vm1107 = vcmp.gt.f32.partialorder %v1079, 0.0
    %vm1108 = vcmp.gt.f32.partialorder %v1084, 0.0
    %vm1109 = vcmp.gt.f32.partialorder %v1087, 0.0
    %vm1110 = vcmp.gt.f32.partialorder %v1092, 0.0
    %vm1111 = vcmp.gt.f32.partialorder %v1095, 0.0
    %vm1112 = vcmp.gt.f32.partialorder %v1100, 0.0
    %vm1113 = vcmp.gt.f32.partialorder %v1103, 0.0
    %v1114 = vrcp.pop %v1076
    %v1115 = vrcp.pop %v1079
    %v1116 = vrcp.pop %v1084
    %v1117 = vrcp.pop %v1087
    %v1118 = vrcp.pop %v1092
    %v1119 = vrcp.pop %v1095
    %v1120 = vrcp.pop %v1100
    %v1121 = vrcp.pop %v1103
    %v1122 = vsel %vm1106, %v1114, 0.0
    %v1123 = vsel %vm1107, %v1115, 0.0
    %v1124 = vsel %vm1108, %v1116, 0.0
    %v1125 = vsel %vm1109, %v1117, 0.0
    %v1126 = vsel %vm1110, %v1118, 0.0
    %v1127 = vsel %vm1111, %v1119, 0.0
    %v1128 = vsel %vm1112, %v1120, 0.0
    %v1129 = vsel %vm1113, %v1121, 0.0
    %1131 = vset.pattern.permute.xlu0 32
    %1132 = vperm.xlu0 %1131, %v1122
    %v1133 = vpop.permute.xlu0 %1132
    %1136 = vset.pattern.permute.xlu0 32
    %1137 = vperm.xlu0 %1136, %v1123
    %v1138 = vpop.permute.xlu0 %1137
    %1141 = vset.pattern.permute.xlu0 32
    %1142 = vperm.xlu0 %1141, %v1124
    %v1143 = vpop.permute.xlu0 %1142
    %1146 = vset.pattern.permute.xlu0 32
    %1147 = vperm.xlu0 %1146, %v1125
    %v1148 = vpop.permute.xlu0 %1147
    %1151 = vset.pattern.permute.xlu0 32
    %1152 = vperm.xlu0 %1151, %v1126
    %v1153 = vpop.permute.xlu0 %1152
    %1156 = vset.pattern.permute.xlu0 32
    %1157 = vperm.xlu0 %1156, %v1127
    %v1158 = vpop.permute.xlu0 %1157
    %1161 = vset.pattern.permute.xlu0 32
    %1162 = vperm.xlu0 %1161, %v1128
    %v1163 = vpop.permute.xlu0 %1162
    %1166 = vset.pattern.permute.xlu0 32
    %1167 = vperm.xlu0 %1166, %v1129
    %v1168 = vpop.permute.xlu0 %1167
    %v1170 = vmul.f32 %v1133, %v1076
    %v1171 = vmul.f32 %v1138, %v1079
    %v1172 = vmul.f32 %v1143, %v1084
    %v1173 = vmul.f32 %v1148, %v1087
    %v1174 = vmul.f32 %v1153, %v1092
    %v1175 = vmul.f32 %v1158, %v1095
    %v1176 = vmul.f32 %v1163, %v1100
    %v1177 = vmul.f32 %v1168, %v1103
    %v1178 = vpack.c.bf16 %v1171, %v1170
    %v1179 = vpack.c.bf16 %v1173, %v1172
    %v1180 = vpack.c.bf16 %v1175, %v1174
    %v1181 = vpack.c.bf16 %v1177, %v1176
    %1182 = vmatprep.subr.bf16.mxu0 0
    %1183 = vmatpush1.bf16.msra.mxu0 %v1178
    %1184 = vmatprep.subr.bf16.mxu0 0
    %1185 = vmatpush1.bf16.msra.mxu0 %v1179
    %1186 = vmatprep.subr.bf16.mxu0 0
    %1187 = vmatpush1.bf16.msra.mxu0 %v1180
    %1188 = vmatprep.subr.bf16.mxu0 0
    %1189 = vmatpush1.bf16.msra.mxu0 %v1181
    %1190 = vmatprep.subr.bf16.mxu0 0
    %1191 = vmatpush1.bf16.msra.mxu0 0
    %1192 = vmatprep.subr.bf16.mxu0 0
    %1193 = vmatpush1.bf16.msra.mxu0 0
    %1194 = vmatprep.subr.bf16.mxu0 0
    %1195 = vmatpush1.bf16.msra.mxu0 0
    %1196 = vmatprep.subr.bf16.mxu0 0
    %1197 = vmatpush1.bf16.msra.mxu0 0
    %1198 = vmatprep.subr.bf16.mxu0 0
    %1199 = vmatpush1.bf16.msra.mxu0 0
    %1200 = vmatprep.subr.bf16.mxu0 0
    %1201 = vmatpush1.bf16.msra.mxu0 0
    %1202 = vmatprep.subr.bf16.mxu0 0
    %1203 = vmatpush1.bf16.msra.mxu0 0
    %1204 = vmatprep.subr.bf16.mxu0 0
    %1205 = vmatpush1.bf16.msra.mxu0 0
    %1206 = vmatprep.subr.bf16.mxu0 0
    %1207 = vmatpush1.bf16.msra.mxu0 0
    %1208 = vmatprep.subr.bf16.mxu0 0
    %1209 = vmatpush1.bf16.msra.mxu0 0
    %1210 = vmatprep.subr.bf16.mxu0 0
    %1211 = vmatpush1.bf16.msra.mxu0 0
    %1212 = vmatprep.subr.bf16.mxu0 0
    %1213 = vmatpush1.bf16.msra.mxu0 0
    %1214 = vmatprep.mubr.bf16.mxu0 0
    %1215 = vmatmul.mubr.bf16.gmra.mrb[0].mxu0 %v1030
    %v1216 = vpop.f32.mrb[0].mxu0
    %v1217 = vadd.f32 0.0, %v1216
    %v1218 = vpop.f32.mrb[0].mxu0
    %v1219 = vpop.f32.mrb[0].mxu0
    %v1220 = vadd.f32 0.0, %v1219
    %v1221 = vpop.f32.mrb[0].mxu0
    %1222 = vmatprep.mubr.bf16.mxu0 0
    %1223 = vmatmul.mubr.bf16.gmra.mrb[0].mxu0 %v1033
    %v1224 = vpop.f32.mrb[0].mxu0
    %v1225 = vadd.f32 0.0, %v1224
    %v1226 = vpop.f32.mrb[0].mxu0
    %v1227 = vpop.f32.mrb[0].mxu0
    %v1228 = vadd.f32 0.0, %v1227
    %v1229 = vpop.f32.mrb[0].mxu0
    %1230 = vmatprep.mubr.bf16.mxu0 0
    %1231 = vmatmul.mubr.bf16.gmra.mrb[0].mxu0 %v1036
    %v1232 = vpop.f32.mrb[0].mxu0
    %v1233 = vadd.f32 0.0, %v1232
    %v1234 = vpop.f32.mrb[0].mxu0
    %v1235 = vpop.f32.mrb[0].mxu0
    %v1236 = vadd.f32 0.0, %v1235
    %v1237 = vpop.f32.mrb[0].mxu0
    %1238 = vmatprep.mubr.bf16.mxu0 0
    %1239 = vmatmul.mubr.bf16.gmra.mrb[0].mxu0 %v1039
    %v1240 = vpop.f32.mrb[0].mxu0
    %v1241 = vadd.f32 0.0, %v1240
    %v1242 = vpop.f32.mrb[0].mxu0
    %v1243 = vpop.f32.mrb[0].mxu0
    %v1244 = vadd.f32 0.0, %v1243
    %v1245 = vpop.f32.mrb[0].mxu0
    %1246 = vdwg.mxu0
    %v1247 = vmul.f32 %v1133, %v1217
    %v1248 = vmul.f32 %v1138, %v1220
    %v1249 = vmul.f32 %v1143, %v1225
    %v1250 = vmul.f32 %v1148, %v1228
    %v1251 = vmul.f32 %v1153, %v1233
    %v1252 = vmul.f32 %v1158, %v1236
    %v1253 = vmul.f32 %v1163, %v1241
    %v1254 = vmul.f32 %v1168, %v1244
    %v1255 = vmul.f32 %v985, 2.5
    %v1256 = vmul.f32 %v986, 2.5
    %v1257 = vmul.f32 %v987, 2.5
    %v1258 = vmul.f32 %v988, 2.5
    %v1259 = vmul.f32 %v989, 2.5
    %v1260 = vmul.f32 %v990, 2.5
    %v1261 = vmul.f32 %v991, 2.5
    %v1262 = vmul.f32 %v992, 2.5
    %v1263 = vmul.f32 %v1170, 2.0
    %v1264 = vmul.f32 %v1171, 2.0
    %v1265 = vmul.f32 %v1172, 2.0
    %v1266 = vmul.f32 %v1173, 2.0
    %v1267 = vmul.f32 %v1174, 2.0
    %v1268 = vmul.f32 %v1175, 2.0
    %v1269 = vmul.f32 %v1176, 2.0
    %v1270 = vmul.f32 %v1177, 2.0
    %v1271 = vadd.f32 %v1255, %v1263
    %v1272 = vadd.f32 %v1256, %v1264
    %v1273 = vadd.f32 %v1257, %v1265
    %v1274 = vadd.f32 %v1258, %v1266
    %v1275 = vadd.f32 %v1259, %v1267
    %v1276 = vadd.f32 %v1260, %v1268
    %v1277 = vadd.f32 %v1261, %v1269
    %v1278 = vadd.f32 %v1262, %v1270
    %v1279 = vmul.f32 %v1247, 0.5
    %v1280 = vmul.f32 %v1248, 0.5
    %v1281 = vmul.f32 %v1249, 0.5
    %v1282 = vmul.f32 %v1250, 0.5
    %v1283 = vmul.f32 %v1251, 0.5
    %v1284 = vmul.f32 %v1252, 0.5
    %v1285 = vmul.f32 %v1253, 0.5
    %v1286 = vmul.f32 %v1254, 0.5
    %v1287 = vadd.f32 %v1271, %v1279
    %v1288 = vadd.f32 %v1272, %v1280
    %v1289 = vadd.f32 %v1273, %v1281
    %v1290 = vadd.f32 %v1274, %v1282
    %v1291 = vadd.f32 %v1275, %v1283
    %v1292 = vadd.f32 %v1276, %v1284
    %v1293 = vadd.f32 %v1277, %v1285
    %v1294 = vadd.f32 %v1278, %v1286
    %s1295 = scalar_lea.vmem %s0, 128
    %v1296 = vld [vmem:[%s1295] sm:$0xf]
    %v1297 = vld [vmem:[%s1295 + $0x4] sm:$0xf]
    %v1298 = vld [vmem:[%s1295 + $0x8] sm:$0xf]
    %v1299 = vld [vmem:[%s1295 + $0xc] sm:$0xf]
    %v1300 = vld [vmem:[%s1295 + $0x10] sm:$0xf]
    %v1301 = vld [vmem:[%s1295 + $0x14] sm:$0xf]
    %v1302 = vld [vmem:[%s1295 + $0x18] sm:$0xf]
    %v1303 = vld [vmem:[%s1295 + $0x1c] sm:$0xf]
    %s1304 = scalar_lea.vmem %s1, 256
    %v1305 = vld [vmem:[%s1304] sm:$0xff]
    %v1306 = vld [vmem:[%s1304 + $0x8] sm:$0xff]
    %v1307 = vld [vmem:[%s1304 + $0x10] sm:$0xff]
    %v1308 = vld [vmem:[%s1304 + $0x18] sm:$0xff]
    %v1309 = vld [vmem:[%s1304 + $0x20] sm:$0xff]
    %v1310 = vld [vmem:[%s1304 + $0x28] sm:$0xff]
    %v1311 = vld [vmem:[%s1304 + $0x30] sm:$0xff]
    %v1312 = vld [vmem:[%s1304 + $0x38] sm:$0xff]
    %v1313 = vpack.c.bf16 %v1306, %v1305
    %v1314 = vpack.c.bf16 %v1308, %v1307
    %v1315 = vpack.c.bf16 %v1310, %v1309
    %v1316 = vpack.c.bf16 %v1312, %v1311
    %v1318 = vsel %vm34, %v1313, 1065369472
    %v1321 = vsel %vm34, %v1314, 1065369472
    %v1324 = vsel %vm34, %v1315, 1065369472
    %v1327 = vsel %vm34, %v1316, 1065369472
    %v1337 = vunpack.c.l.b16 %v1296
    %v1338 = vunpack.c.l.b16 %v1297
    %v1339 = vunpack.c.l.b16 %v1298
    %v1340 = vunpack.c.l.b16 %v1299
    %v1341 = vunpack.c.l.b16 %v1300
    %v1342 = vunpack.c.l.b16 %v1301
    %v1343 = vunpack.c.l.b16 %v1302
    %v1344 = vunpack.c.l.b16 %v1303
    %v1345 = vpack.c.b16 %v1338, %v1337
    %v1346 = vpack.c.b16 %v1340, %v1339
    %v1347 = vpack.c.b16 %v1342, %v1341
    %v1348 = vpack.c.b16 %v1344, %v1343
    %v1350 = vsel %vm68, %v1345, 0
    %v1353 = vsel %vm68, %v1346, 0
    %v1356 = vsel %vm68, %v1347, 0
    %v1359 = vsel %vm68, %v1348, 0
    %1361 = vmatprep.subr.bf16.mxu0 0
    %1362 = vmatpush1.bf16.msra.mxu0 %v1318
    %1363 = vmatprep.subr.bf16.mxu0 0
    %1364 = vmatpush1.bf16.msra.mxu0 %v1321
    %1365 = vmatprep.subr.bf16.mxu0 0
    %1366 = vmatpush1.bf16.msra.mxu0 %v1324
    %1367 = vmatprep.subr.bf16.mxu0 0
    %1368 = vmatpush1.bf16.msra.mxu0 %v1327
    %1369 = vmatprep.subr.bf16.mxu0 0
    %1370 = vmatpush1.bf16.msra.mxu0 0
    %1371 = vmatprep.subr.bf16.mxu0 0
    %1372 = vmatpush1.bf16.msra.mxu0 0
    %1373 = vmatprep.subr.bf16.mxu0 0
    %1374 = vmatpush1.bf16.msra.mxu0 0
    %1375 = vmatprep.subr.bf16.mxu0 0
    %1376 = vmatpush1.bf16.msra.mxu0 0
    %1377 = vmatprep.subr.bf16.mxu0 0
    %1378 = vmatpush1.bf16.msra.mxu0 0
    %1379 = vmatprep.subr.bf16.mxu0 0
    %1380 = vmatpush1.bf16.msra.mxu0 0
    %1381 = vmatprep.subr.bf16.mxu0 0
    %1382 = vmatpush1.bf16.msra.mxu0 0
    %1383 = vmatprep.subr.bf16.mxu0 0
    %1384 = vmatpush1.bf16.msra.mxu0 0
    %1385 = vmatprep.subr.bf16.mxu0 0
    %1386 = vmatpush1.bf16.msra.mxu0 0
    %1387 = vmatprep.subr.bf16.mxu0 0
    %1388 = vmatpush1.bf16.msra.mxu0 0
    %1389 = vmatprep.subr.bf16.mxu0 0
    %1390 = vmatpush1.bf16.msra.mxu0 0
    %1391 = vmatprep.subr.bf16.mxu0 0
    %1392 = vmatpush1.bf16.msra.mxu0 0
    %1393 = vmatprep.mubr.bf16.mxu0 0
    %1394 = vmatmul.mubr.bf16.gmra.mrb[0].mxu0 %v1350
    %v1395 = vpop.f32.mrb[0].mxu0
    %v1396 = vadd.f32 0.0, %v1395
    %v1397 = vpop.f32.mrb[0].mxu0
    %v1398 = vpop.f32.mrb[0].mxu0
    %v1399 = vadd.f32 0.0, %v1398
    %v1400 = vpop.f32.mrb[0].mxu0
    %1401 = vmatprep.mubr.bf16.mxu0 0
    %1402 = vmatmul.mubr.bf16.gmra.mrb[0].mxu0 %v1353
    %v1403 = vpop.f32.mrb[0].mxu0
    %v1404 = vadd.f32 0.0, %v1403
    %v1405 = vpop.f32.mrb[0].mxu0
    %v1406 = vpop.f32.mrb[0].mxu0
    %v1407 = vadd.f32 0.0, %v1406
    %v1408 = vpop.f32.mrb[0].mxu0
    %1409 = vmatprep.mubr.bf16.mxu0 0
    %1410 = vmatmul.mubr.bf16.gmra.mrb[0].mxu0 %v1356
    %v1411 = vpop.f32.mrb[0].mxu0
    %v1412 = vadd.f32 0.0, %v1411
    %v1413 = vpop.f32.mrb[0].mxu0
    %v1414 = vpop.f32.mrb[0].mxu0
    %v1415 = vadd.f32 0.0, %v1414
    %v1416 = vpop.f32.mrb[0].mxu0
    %1417 = vmatprep.mubr.bf16.mxu0 0
    %1418 = vmatmul.mubr.bf16.gmra.mrb[0].mxu0 %v1359
    %v1419 = vpop.f32.mrb[0].mxu0
    %v1420 = vadd.f32 0.0, %v1419
    %v1421 = vpop.f32.mrb[0].mxu0
    %v1422 = vpop.f32.mrb[0].mxu0
    %v1423 = vadd.f32 0.0, %v1422
    %v1424 = vpop.f32.mrb[0].mxu0
    %1425 = vdwg.mxu0
    %vm1426 = vcmp.gt.f32.partialorder %v1396, 0.0
    %vm1427 = vcmp.gt.f32.partialorder %v1399, 0.0
    %vm1428 = vcmp.gt.f32.partialorder %v1404, 0.0
    %vm1429 = vcmp.gt.f32.partialorder %v1407, 0.0
    %vm1430 = vcmp.gt.f32.partialorder %v1412, 0.0
    %vm1431 = vcmp.gt.f32.partialorder %v1415, 0.0
    %vm1432 = vcmp.gt.f32.partialorder %v1420, 0.0
    %vm1433 = vcmp.gt.f32.partialorder %v1423, 0.0
    %v1434 = vrcp.pop %v1396
    %v1435 = vrcp.pop %v1399
    %v1436 = vrcp.pop %v1404
    %v1437 = vrcp.pop %v1407
    %v1438 = vrcp.pop %v1412
    %v1439 = vrcp.pop %v1415
    %v1440 = vrcp.pop %v1420
    %v1441 = vrcp.pop %v1423
    %v1442 = vsel %vm1426, %v1434, 0.0
    %v1443 = vsel %vm1427, %v1435, 0.0
    %v1444 = vsel %vm1428, %v1436, 0.0
    %v1445 = vsel %vm1429, %v1437, 0.0
    %v1446 = vsel %vm1430, %v1438, 0.0
    %v1447 = vsel %vm1431, %v1439, 0.0
    %v1448 = vsel %vm1432, %v1440, 0.0
    %v1449 = vsel %vm1433, %v1441, 0.0
    %1451 = vset.pattern.permute.xlu0 32
    %1452 = vperm.xlu0 %1451, %v1442
    %v1453 = vpop.permute.xlu0 %1452
    %1456 = vset.pattern.permute.xlu0 32
    %1457 = vperm.xlu0 %1456, %v1443
    %v1458 = vpop.permute.xlu0 %1457
    %1461 = vset.pattern.permute.xlu0 32
    %1462 = vperm.xlu0 %1461, %v1444
    %v1463 = vpop.permute.xlu0 %1462
    %1466 = vset.pattern.permute.xlu0 32
    %1467 = vperm.xlu0 %1466, %v1445
    %v1468 = vpop.permute.xlu0 %1467
    %1471 = vset.pattern.permute.xlu0 32
    %1472 = vperm.xlu0 %1471, %v1446
    %v1473 = vpop.permute.xlu0 %1472
    %1476 = vset.pattern.permute.xlu0 32
    %1477 = vperm.xlu0 %1476, %v1447
    %v1478 = vpop.permute.xlu0 %1477
    %1481 = vset.pattern.permute.xlu0 32
    %1482 = vperm.xlu0 %1481, %v1448
    %v1483 = vpop.permute.xlu0 %1482
    %1486 = vset.pattern.permute.xlu0 32
    %1487 = vperm.xlu0 %1486, %v1449
    %v1488 = vpop.permute.xlu0 %1487
    %v1490 = vmul.f32 %v1453, %v1396
    %v1491 = vmul.f32 %v1458, %v1399
    %v1492 = vmul.f32 %v1463, %v1404
    %v1493 = vmul.f32 %v1468, %v1407
    %v1494 = vmul.f32 %v1473, %v1412
    %v1495 = vmul.f32 %v1478, %v1415
    %v1496 = vmul.f32 %v1483, %v1420
    %v1497 = vmul.f32 %v1488, %v1423
    %v1498 = vpack.c.bf16 %v1491, %v1490
    %v1499 = vpack.c.bf16 %v1493, %v1492
    %v1500 = vpack.c.bf16 %v1495, %v1494
    %v1501 = vpack.c.bf16 %v1497, %v1496
    %1502 = vmatprep.subr.bf16.mxu0 0
    %1503 = vmatpush1.bf16.msra.mxu0 %v1498
    %1504 = vmatprep.subr.bf16.mxu0 0
    %1505 = vmatpush1.bf16.msra.mxu0 %v1499
    %1506 = vmatprep.subr.bf16.mxu0 0
    %1507 = vmatpush1.bf16.msra.mxu0 %v1500
    %1508 = vmatprep.subr.bf16.mxu0 0
    %1509 = vmatpush1.bf16.msra.mxu0 %v1501
    %1510 = vmatprep.subr.bf16.mxu0 0
    %1511 = vmatpush1.bf16.msra.mxu0 0
    %1512 = vmatprep.subr.bf16.mxu0 0
    %1513 = vmatpush1.bf16.msra.mxu0 0
    %1514 = vmatprep.subr.bf16.mxu0 0
    %1515 = vmatpush1.bf16.msra.mxu0 0
    %1516 = vmatprep.subr.bf16.mxu0 0
    %1517 = vmatpush1.bf16.msra.mxu0 0
    %1518 = vmatprep.subr.bf16.mxu0 0
    %1519 = vmatpush1.bf16.msra.mxu0 0
    %1520 = vmatprep.subr.bf16.mxu0 0
    %1521 = vmatpush1.bf16.msra.mxu0 0
    %1522 = vmatprep.subr.bf16.mxu0 0
    %1523 = vmatpush1.bf16.msra.mxu0 0
    %1524 = vmatprep.subr.bf16.mxu0 0
    %1525 = vmatpush1.bf16.msra.mxu0 0
    %1526 = vmatprep.subr.bf16.mxu0 0
    %1527 = vmatpush1.bf16.msra.mxu0 0
    %1528 = vmatprep.subr.bf16.mxu0 0
    %1529 = vmatpush1.bf16.msra.mxu0 0
    %1530 = vmatprep.subr.bf16.mxu0 0
    %1531 = vmatpush1.bf16.msra.mxu0 0
    %1532 = vmatprep.subr.bf16.mxu0 0
    %1533 = vmatpush1.bf16.msra.mxu0 0
    %1534 = vmatprep.mubr.bf16.mxu0 0
    %1535 = vmatmul.mubr.bf16.gmra.mrb[0].mxu0 %v1350
    %v1536 = vpop.f32.mrb[0].mxu0
    %v1537 = vadd.f32 0.0, %v1536
    %v1538 = vpop.f32.mrb[0].mxu0
    %v1539 = vpop.f32.mrb[0].mxu0
    %v1540 = vadd.f32 0.0, %v1539
    %v1541 = vpop.f32.mrb[0].mxu0
    %1542 = vmatprep.mubr.bf16.mxu0 0
    %1543 = vmatmul.mubr.bf16.gmra.mrb[0].mxu0 %v1353
    %v1544 = vpop.f32.mrb[0].mxu0
    %v1545 = vadd.f32 0.0, %v1544
    %v1546 = vpop.f32.mrb[0].mxu0
    %v1547 = vpop.f32.mrb[0].mxu0
    %v1548 = vadd.f32 0.0, %v1547
    %v1549 = vpop.f32.mrb[0].mxu0
    %1550 = vmatprep.mubr.bf16.mxu0 0
    %1551 = vmatmul.mubr.bf16.gmra.mrb[0].mxu0 %v1356
    %v1552 = vpop.f32.mrb[0].mxu0
    %v1553 = vadd.f32 0.0, %v1552
    %v1554 = vpop.f32.mrb[0].mxu0
    %v1555 = vpop.f32.mrb[0].mxu0
    %v1556 = vadd.f32 0.0, %v1555
    %v1557 = vpop.f32.mrb[0].mxu0
    %1558 = vmatprep.mubr.bf16.mxu0 0
    %1559 = vmatmul.mubr.bf16.gmra.mrb[0].mxu0 %v1359
    %v1560 = vpop.f32.mrb[0].mxu0
    %v1561 = vadd.f32 0.0, %v1560
    %v1562 = vpop.f32.mrb[0].mxu0
    %v1563 = vpop.f32.mrb[0].mxu0
    %v1564 = vadd.f32 0.0, %v1563
    %v1565 = vpop.f32.mrb[0].mxu0
    %1566 = vdwg.mxu0
    %v1567 = vmul.f32 %v1453, %v1537
    %v1568 = vmul.f32 %v1458, %v1540
    %v1569 = vmul.f32 %v1463, %v1545
    %v1570 = vmul.f32 %v1468, %v1548
    %v1571 = vmul.f32 %v1473, %v1553
    %v1572 = vmul.f32 %v1478, %v1556
    %v1573 = vmul.f32 %v1483, %v1561
    %v1574 = vmul.f32 %v1488, %v1564
    %v1575 = vmul.f32 %v1305, 2.5
    %v1576 = vmul.f32 %v1306, 2.5
    %v1577 = vmul.f32 %v1307, 2.5
    %v1578 = vmul.f32 %v1308, 2.5
    %v1579 = vmul.f32 %v1309, 2.5
    %v1580 = vmul.f32 %v1310, 2.5
    %v1581 = vmul.f32 %v1311, 2.5
    %v1582 = vmul.f32 %v1312, 2.5
    %v1583 = vmul.f32 %v1490, 2.0
    %v1584 = vmul.f32 %v1491, 2.0
    %v1585 = vmul.f32 %v1492, 2.0
    %v1586 = vmul.f32 %v1493, 2.0
    %v1587 = vmul.f32 %v1494, 2.0
    %v1588 = vmul.f32 %v1495, 2.0
    %v1589 = vmul.f32 %v1496, 2.0
    %v1590 = vmul.f32 %v1497, 2.0
    %v1591 = vadd.f32 %v1575, %v1583
    %v1592 = vadd.f32 %v1576, %v1584
    %v1593 = vadd.f32 %v1577, %v1585
    %v1594 = vadd.f32 %v1578, %v1586
    %v1595 = vadd.f32 %v1579, %v1587
    %v1596 = vadd.f32 %v1580, %v1588
    %v1597 = vadd.f32 %v1581, %v1589
    %v1598 = vadd.f32 %v1582, %v1590
    %v1599 = vmul.f32 %v1567, 0.5
    %v1600 = vmul.f32 %v1568, 0.5
    %v1601 = vmul.f32 %v1569, 0.5
    %v1602 = vmul.f32 %v1570, 0.5
    %v1603 = vmul.f32 %v1571, 0.5
    %v1604 = vmul.f32 %v1572, 0.5
    %v1605 = vmul.f32 %v1573, 0.5
    %v1606 = vmul.f32 %v1574, 0.5
    %v1607 = vadd.f32 %v1591, %v1599
    %v1608 = vadd.f32 %v1592, %v1600
    %v1609 = vadd.f32 %v1593, %v1601
    %v1610 = vadd.f32 %v1594, %v1602
    %v1611 = vadd.f32 %v1595, %v1603
    %v1612 = vadd.f32 %v1596, %v1604
    %v1613 = vadd.f32 %v1597, %v1605
    %v1614 = vadd.f32 %v1598, %v1606
    %s1615 = scalar_lea.vmem %s0, 160
    %v1616 = vld [vmem:[%s1615] sm:$0xf]
    %v1617 = vld [vmem:[%s1615 + $0x4] sm:$0xf]
    %v1618 = vld [vmem:[%s1615 + $0x8] sm:$0xf]
    %v1619 = vld [vmem:[%s1615 + $0xc] sm:$0xf]
    %v1620 = vld [vmem:[%s1615 + $0x10] sm:$0xf]
    %v1621 = vld [vmem:[%s1615 + $0x14] sm:$0xf]
    %v1622 = vld [vmem:[%s1615 + $0x18] sm:$0xf]
    %v1623 = vld [vmem:[%s1615 + $0x1c] sm:$0xf]
    %s1624 = scalar_lea.vmem %s1, 320
    %v1625 = vld [vmem:[%s1624] sm:$0xff]
    %v1626 = vld [vmem:[%s1624 + $0x8] sm:$0xff]
    %v1627 = vld [vmem:[%s1624 + $0x10] sm:$0xff]
    %v1628 = vld [vmem:[%s1624 + $0x18] sm:$0xff]
    %v1629 = vld [vmem:[%s1624 + $0x20] sm:$0xff]
    %v1630 = vld [vmem:[%s1624 + $0x28] sm:$0xff]
    %v1631 = vld [vmem:[%s1624 + $0x30] sm:$0xff]
    %v1632 = vld [vmem:[%s1624 + $0x38] sm:$0xff]
    %v1633 = vpack.c.bf16 %v1626, %v1625
    %v1634 = vpack.c.bf16 %v1628, %v1627
    %v1635 = vpack.c.bf16 %v1630, %v1629
    %v1636 = vpack.c.bf16 %v1632, %v1631
    %v1638 = vsel %vm34, %v1633, 1065369472
    %v1641 = vsel %vm34, %v1634, 1065369472
    %v1644 = vsel %vm34, %v1635, 1065369472
    %v1647 = vsel %vm34, %v1636, 1065369472
    %v1657 = vunpack.c.l.b16 %v1616
    %v1658 = vunpack.c.l.b16 %v1617
    %v1659 = vunpack.c.l.b16 %v1618
    %v1660 = vunpack.c.l.b16 %v1619
    %v1661 = vunpack.c.l.b16 %v1620
    %v1662 = vunpack.c.l.b16 %v1621
    %v1663 = vunpack.c.l.b16 %v1622
    %v1664 = vunpack.c.l.b16 %v1623
    %v1665 = vpack.c.b16 %v1658, %v1657
    %v1666 = vpack.c.b16 %v1660, %v1659
    %v1667 = vpack.c.b16 %v1662, %v1661
    %v1668 = vpack.c.b16 %v1664, %v1663
    %v1670 = vsel %vm68, %v1665, 0
    %v1673 = vsel %vm68, %v1666, 0
    %v1676 = vsel %vm68, %v1667, 0
    %v1679 = vsel %vm68, %v1668, 0
    %1681 = vmatprep.subr.bf16.mxu0 0
    %1682 = vmatpush1.bf16.msra.mxu0 %v1638
    %1683 = vmatprep.subr.bf16.mxu0 0
    %1684 = vmatpush1.bf16.msra.mxu0 %v1641
    %1685 = vmatprep.subr.bf16.mxu0 0
    %1686 = vmatpush1.bf16.msra.mxu0 %v1644
    %1687 = vmatprep.subr.bf16.mxu0 0
    %1688 = vmatpush1.bf16.msra.mxu0 %v1647
    %1689 = vmatprep.subr.bf16.mxu0 0
    %1690 = vmatpush1.bf16.msra.mxu0 0
    %1691 = vmatprep.subr.bf16.mxu0 0
    %1692 = vmatpush1.bf16.msra.mxu0 0
    %1693 = vmatprep.subr.bf16.mxu0 0
    %1694 = vmatpush1.bf16.msra.mxu0 0
    %1695 = vmatprep.subr.bf16.mxu0 0
    %1696 = vmatpush1.bf16.msra.mxu0 0
    %1697 = vmatprep.subr.bf16.mxu0 0
    %1698 = vmatpush1.bf16.msra.mxu0 0
    %1699 = vmatprep.subr.bf16.mxu0 0
    %1700 = vmatpush1.bf16.msra.mxu0 0
    %1701 = vmatprep.subr.bf16.mxu0 0
    %1702 = vmatpush1.bf16.msra.mxu0 0
    %1703 = vmatprep.subr.bf16.mxu0 0
    %1704 = vmatpush1.bf16.msra.mxu0 0
    %1705 = vmatprep.subr.bf16.mxu0 0
    %1706 = vmatpush1.bf16.msra.mxu0 0
    %1707 = vmatprep.subr.bf16.mxu0 0
    %1708 = vmatpush1.bf16.msra.mxu0 0
    %1709 = vmatprep.subr.bf16.mxu0 0
    %1710 = vmatpush1.bf16.msra.mxu0 0
    %1711 = vmatprep.subr.bf16.mxu0 0
    %1712 = vmatpush1.bf16.msra.mxu0 0
    %1713 = vmatprep.mubr.bf16.mxu0 0
    %1714 = vmatmul.mubr.bf16.gmra.mrb[0].mxu0 %v1670
    %v1715 = vpop.f32.mrb[0].mxu0
    %v1716 = vadd.f32 0.0, %v1715
    %v1717 = vpop.f32.mrb[0].mxu0
    %v1718 = vpop.f32.mrb[0].mxu0
    %v1719 = vadd.f32 0.0, %v1718
    %v1720 = vpop.f32.mrb[0].mxu0
    %1721 = vmatprep.mubr.bf16.mxu0 0
    %1722 = vmatmul.mubr.bf16.gmra.mrb[0].mxu0 %v1673
    %v1723 = vpop.f32.mrb[0].mxu0
    %v1724 = vadd.f32 0.0, %v1723
    %v1725 = vpop.f32.mrb[0].mxu0
    %v1726 = vpop.f32.mrb[0].mxu0
    %v1727 = vadd.f32 0.0, %v1726
    %v1728 = vpop.f32.mrb[0].mxu0
    %1729 = vmatprep.mubr.bf16.mxu0 0
    %1730 = vmatmul.mubr.bf16.gmra.mrb[0].mxu0 %v1676
    %v1731 = vpop.f32.mrb[0].mxu0
    %v1732 = vadd.f32 0.0, %v1731
    %v1733 = vpop.f32.mrb[0].mxu0
    %v1734 = vpop.f32.mrb[0].mxu0
    %v1735 = vadd.f32 0.0, %v1734
    %v1736 = vpop.f32.mrb[0].mxu0
    %1737 = vmatprep.mubr.bf16.mxu0 0
    %1738 = vmatmul.mubr.bf16.gmra.mrb[0].mxu0 %v1679
    %v1739 = vpop.f32.mrb[0].mxu0
    %v1740 = vadd.f32 0.0, %v1739
    %v1741 = vpop.f32.mrb[0].mxu0
    %v1742 = vpop.f32.mrb[0].mxu0
    %v1743 = vadd.f32 0.0, %v1742
    %v1744 = vpop.f32.mrb[0].mxu0
    %1745 = vdwg.mxu0
    %vm1746 = vcmp.gt.f32.partialorder %v1716, 0.0
    %vm1747 = vcmp.gt.f32.partialorder %v1719, 0.0
    %vm1748 = vcmp.gt.f32.partialorder %v1724, 0.0
    %vm1749 = vcmp.gt.f32.partialorder %v1727, 0.0
    %vm1750 = vcmp.gt.f32.partialorder %v1732, 0.0
    %vm1751 = vcmp.gt.f32.partialorder %v1735, 0.0
    %vm1752 = vcmp.gt.f32.partialorder %v1740, 0.0
    %vm1753 = vcmp.gt.f32.partialorder %v1743, 0.0
    %v1754 = vrcp.pop %v1716
    %v1755 = vrcp.pop %v1719
    %v1756 = vrcp.pop %v1724
    %v1757 = vrcp.pop %v1727
    %v1758 = vrcp.pop %v1732
    %v1759 = vrcp.pop %v1735
    %v1760 = vrcp.pop %v1740
    %v1761 = vrcp.pop %v1743
    %v1762 = vsel %vm1746, %v1754, 0.0
    %v1763 = vsel %vm1747, %v1755, 0.0
    %v1764 = vsel %vm1748, %v1756, 0.0
    %v1765 = vsel %vm1749, %v1757, 0.0
    %v1766 = vsel %vm1750, %v1758, 0.0
    %v1767 = vsel %vm1751, %v1759, 0.0
    %v1768 = vsel %vm1752, %v1760, 0.0
    %v1769 = vsel %vm1753, %v1761, 0.0
    %1771 = vset.pattern.permute.xlu0 32
    %1772 = vperm.xlu0 %1771, %v1762
    %v1773 = vpop.permute.xlu0 %1772
    %1776 = vset.pattern.permute.xlu0 32
    %1777 = vperm.xlu0 %1776, %v1763
    %v1778 = vpop.permute.xlu0 %1777
    %1781 = vset.pattern.permute.xlu0 32
    %1782 = vperm.xlu0 %1781, %v1764
    %v1783 = vpop.permute.xlu0 %1782
    %1786 = vset.pattern.permute.xlu0 32
    %1787 = vperm.xlu0 %1786, %v1765
    %v1788 = vpop.permute.xlu0 %1787
    %1791 = vset.pattern.permute.xlu0 32
    %1792 = vperm.xlu0 %1791, %v1766
    %v1793 = vpop.permute.xlu0 %1792
    %1796 = vset.pattern.permute.xlu0 32
    %1797 = vperm.xlu0 %1796, %v1767
    %v1798 = vpop.permute.xlu0 %1797
    %1801 = vset.pattern.permute.xlu0 32
    %1802 = vperm.xlu0 %1801, %v1768
    %v1803 = vpop.permute.xlu0 %1802
    %1806 = vset.pattern.permute.xlu0 32
    %1807 = vperm.xlu0 %1806, %v1769
    %v1808 = vpop.permute.xlu0 %1807
    %v1810 = vmul.f32 %v1773, %v1716
    %v1811 = vmul.f32 %v1778, %v1719
    %v1812 = vmul.f32 %v1783, %v1724
    %v1813 = vmul.f32 %v1788, %v1727
    %v1814 = vmul.f32 %v1793, %v1732
    %v1815 = vmul.f32 %v1798, %v1735
    %v1816 = vmul.f32 %v1803, %v1740
    %v1817 = vmul.f32 %v1808, %v1743
    %v1818 = vpack.c.bf16 %v1811, %v1810
    %v1819 = vpack.c.bf16 %v1813, %v1812
    %v1820 = vpack.c.bf16 %v1815, %v1814
    %v1821 = vpack.c.bf16 %v1817, %v1816
    %1822 = vmatprep.subr.bf16.mxu0 0
    %1823 = vmatpush1.bf16.msra.mxu0 %v1818
    %1824 = vmatprep.subr.bf16.mxu0 0
    %1825 = vmatpush1.bf16.msra.mxu0 %v1819
    %1826 = vmatprep.subr.bf16.mxu0 0
    %1827 = vmatpush1.bf16.msra.mxu0 %v1820
    %1828 = vmatprep.subr.bf16.mxu0 0
    %1829 = vmatpush1.bf16.msra.mxu0 %v1821
    %1830 = vmatprep.subr.bf16.mxu0 0
    %1831 = vmatpush1.bf16.msra.mxu0 0
    %1832 = vmatprep.subr.bf16.mxu0 0
    %1833 = vmatpush1.bf16.msra.mxu0 0
    %1834 = vmatprep.subr.bf16.mxu0 0
    %1835 = vmatpush1.bf16.msra.mxu0 0
    %1836 = vmatprep.subr.bf16.mxu0 0
    %1837 = vmatpush1.bf16.msra.mxu0 0
    %1838 = vmatprep.subr.bf16.mxu0 0
    %1839 = vmatpush1.bf16.msra.mxu0 0
    %1840 = vmatprep.subr.bf16.mxu0 0
    %1841 = vmatpush1.bf16.msra.mxu0 0
    %1842 = vmatprep.subr.bf16.mxu0 0
    %1843 = vmatpush1.bf16.msra.mxu0 0
    %1844 = vmatprep.subr.bf16.mxu0 0
    %1845 = vmatpush1.bf16.msra.mxu0 0
    %1846 = vmatprep.subr.bf16.mxu0 0
    %1847 = vmatpush1.bf16.msra.mxu0 0
    %1848 = vmatprep.subr.bf16.mxu0 0
    %1849 = vmatpush1.bf16.msra.mxu0 0
    %1850 = vmatprep.subr.bf16.mxu0 0
    %1851 = vmatpush1.bf16.msra.mxu0 0
    %1852 = vmatprep.subr.bf16.mxu0 0
    %1853 = vmatpush1.bf16.msra.mxu0 0
    %1854 = vmatprep.mubr.bf16.mxu0 0
    %1855 = vmatmul.mubr.bf16.gmra.mrb[0].mxu0 %v1670
    %v1856 = vpop.f32.mrb[0].mxu0
    %v1857 = vadd.f32 0.0, %v1856
    %v1858 = vpop.f32.mrb[0].mxu0
    %v1859 = vpop.f32.mrb[0].mxu0
    %v1860 = vadd.f32 0.0, %v1859
    %v1861 = vpop.f32.mrb[0].mxu0
    %1862 = vmatprep.mubr.bf16.mxu0 0
    %1863 = vmatmul.mubr.bf16.gmra.mrb[0].mxu0 %v1673
    %v1864 = vpop.f32.mrb[0].mxu0
    %v1865 = vadd.f32 0.0, %v1864
    %v1866 = vpop.f32.mrb[0].mxu0
    %v1867 = vpop.f32.mrb[0].mxu0
    %v1868 = vadd.f32 0.0, %v1867
    %v1869 = vpop.f32.mrb[0].mxu0
    %1870 = vmatprep.mubr.bf16.mxu0 0
    %1871 = vmatmul.mubr.bf16.gmra.mrb[0].mxu0 %v1676
    %v1872 = vpop.f32.mrb[0].mxu0
    %v1873 = vadd.f32 0.0, %v1872
    %v1874 = vpop.f32.mrb[0].mxu0
    %v1875 = vpop.f32.mrb[0].mxu0
    %v1876 = vadd.f32 0.0, %v1875
    %v1877 = vpop.f32.mrb[0].mxu0
    %1878 = vmatprep.mubr.bf16.mxu0 0
    %1879 = vmatmul.mubr.bf16.gmra.mrb[0].mxu0 %v1679
    %v1880 = vpop.f32.mrb[0].mxu0
    %v1881 = vadd.f32 0.0, %v1880
    %v1882 = vpop.f32.mrb[0].mxu0
    %v1883 = vpop.f32.mrb[0].mxu0
    %v1884 = vadd.f32 0.0, %v1883
    %v1885 = vpop.f32.mrb[0].mxu0
    %1886 = vdwg.mxu0
    %v1887 = vmul.f32 %v1773, %v1857
    %v1888 = vmul.f32 %v1778, %v1860
    %v1889 = vmul.f32 %v1783, %v1865
    %v1890 = vmul.f32 %v1788, %v1868
    %v1891 = vmul.f32 %v1793, %v1873
    %v1892 = vmul.f32 %v1798, %v1876
    %v1893 = vmul.f32 %v1803, %v1881
    %v1894 = vmul.f32 %v1808, %v1884
    %v1895 = vmul.f32 %v1625, 2.5
    %v1896 = vmul.f32 %v1626, 2.5
    %v1897 = vmul.f32 %v1627, 2.5
    %v1898 = vmul.f32 %v1628, 2.5
    %v1899 = vmul.f32 %v1629, 2.5
    %v1900 = vmul.f32 %v1630, 2.5
    %v1901 = vmul.f32 %v1631, 2.5
    %v1902 = vmul.f32 %v1632, 2.5
    %v1903 = vmul.f32 %v1810, 2.0
    %v1904 = vmul.f32 %v1811, 2.0
    %v1905 = vmul.f32 %v1812, 2.0
    %v1906 = vmul.f32 %v1813, 2.0
    %v1907 = vmul.f32 %v1814, 2.0
    %v1908 = vmul.f32 %v1815, 2.0
    %v1909 = vmul.f32 %v1816, 2.0
    %v1910 = vmul.f32 %v1817, 2.0
    %v1911 = vadd.f32 %v1895, %v1903
    %v1912 = vadd.f32 %v1896, %v1904
    %v1913 = vadd.f32 %v1897, %v1905
    %v1914 = vadd.f32 %v1898, %v1906
    %v1915 = vadd.f32 %v1899, %v1907
    %v1916 = vadd.f32 %v1900, %v1908
    %v1917 = vadd.f32 %v1901, %v1909
    %v1918 = vadd.f32 %v1902, %v1910
    %v1919 = vmul.f32 %v1887, 0.5
    %v1920 = vmul.f32 %v1888, 0.5
    %v1921 = vmul.f32 %v1889, 0.5
    %v1922 = vmul.f32 %v1890, 0.5
    %v1923 = vmul.f32 %v1891, 0.5
    %v1924 = vmul.f32 %v1892, 0.5
    %v1925 = vmul.f32 %v1893, 0.5
    %v1926 = vmul.f32 %v1894, 0.5
    %v1927 = vadd.f32 %v1911, %v1919
    %v1928 = vadd.f32 %v1912, %v1920
    %v1929 = vadd.f32 %v1913, %v1921
    %v1930 = vadd.f32 %v1914, %v1922
    %v1931 = vadd.f32 %v1915, %v1923
    %v1932 = vadd.f32 %v1916, %v1924
    %v1933 = vadd.f32 %v1917, %v1925
    %v1934 = vadd.f32 %v1918, %v1926
    %s1935 = scalar_lea.vmem %s0, 192
    %v1936 = vld [vmem:[%s1935] sm:$0xf]
    %v1937 = vld [vmem:[%s1935 + $0x4] sm:$0xf]
    %v1938 = vld [vmem:[%s1935 + $0x8] sm:$0xf]
    %v1939 = vld [vmem:[%s1935 + $0xc] sm:$0xf]
    %v1940 = vld [vmem:[%s1935 + $0x10] sm:$0xf]
    %v1941 = vld [vmem:[%s1935 + $0x14] sm:$0xf]
    %v1942 = vld [vmem:[%s1935 + $0x18] sm:$0xf]
    %v1943 = vld [vmem:[%s1935 + $0x1c] sm:$0xf]
    %s1944 = scalar_lea.vmem %s1, 384
    %v1945 = vld [vmem:[%s1944] sm:$0xff]
    %v1946 = vld [vmem:[%s1944 + $0x8] sm:$0xff]
    %v1947 = vld [vmem:[%s1944 + $0x10] sm:$0xff]
    %v1948 = vld [vmem:[%s1944 + $0x18] sm:$0xff]
    %v1949 = vld [vmem:[%s1944 + $0x20] sm:$0xff]
    %v1950 = vld [vmem:[%s1944 + $0x28] sm:$0xff]
    %v1951 = vld [vmem:[%s1944 + $0x30] sm:$0xff]
    %v1952 = vld [vmem:[%s1944 + $0x38] sm:$0xff]
    %v1953 = vpack.c.bf16 %v1946, %v1945
    %v1954 = vpack.c.bf16 %v1948, %v1947
    %v1955 = vpack.c.bf16 %v1950, %v1949
    %v1956 = vpack.c.bf16 %v1952, %v1951
    %v1958 = vsel %vm34, %v1953, 1065369472
    %v1961 = vsel %vm34, %v1954, 1065369472
    %v1964 = vsel %vm34, %v1955, 1065369472
    %v1967 = vsel %vm34, %v1956, 1065369472
    %v1977 = vunpack.c.l.b16 %v1936
    %v1978 = vunpack.c.l.b16 %v1937
    %v1979 = vunpack.c.l.b16 %v1938
    %v1980 = vunpack.c.l.b16 %v1939
    %v1981 = vunpack.c.l.b16 %v1940
    %v1982 = vunpack.c.l.b16 %v1941
    %v1983 = vunpack.c.l.b16 %v1942
    %v1984 = vunpack.c.l.b16 %v1943
    %v1985 = vpack.c.b16 %v1978, %v1977
    %v1986 = vpack.c.b16 %v1980, %v1979
    %v1987 = vpack.c.b16 %v1982, %v1981
    %v1988 = vpack.c.b16 %v1984, %v1983
    %v1990 = vsel %vm68, %v1985, 0
    %v1993 = vsel %vm68, %v1986, 0
    %v1996 = vsel %vm68, %v1987, 0
    %v1999 = vsel %vm68, %v1988, 0
    %2001 = vmatprep.subr.bf16.mxu0 0
    %2002 = vmatpush1.bf16.msra.mxu0 %v1958
    %2003 = vmatprep.subr.bf16.mxu0 0
    %2004 = vmatpush1.bf16.msra.mxu0 %v1961
    %2005 = vmatprep.subr.bf16.mxu0 0
    %2006 = vmatpush1.bf16.msra.mxu0 %v1964
    %2007 = vmatprep.subr.bf16.mxu0 0
    %2008 = vmatpush1.bf16.msra.mxu0 %v1967
    %2009 = vmatprep.subr.bf16.mxu0 0
    %2010 = vmatpush1.bf16.msra.mxu0 0
    %2011 = vmatprep.subr.bf16.mxu0 0
    %2012 = vmatpush1.bf16.msra.mxu0 0
    %2013 = vmatprep.subr.bf16.mxu0 0
    %2014 = vmatpush1.bf16.msra.mxu0 0
    %2015 = vmatprep.subr.bf16.mxu0 0
    %2016 = vmatpush1.bf16.msra.mxu0 0
    %2017 = vmatprep.subr.bf16.mxu0 0
    %2018 = vmatpush1.bf16.msra.mxu0 0
    %2019 = vmatprep.subr.bf16.mxu0 0
    %2020 = vmatpush1.bf16.msra.mxu0 0
    %2021 = vmatprep.subr.bf16.mxu0 0
    %2022 = vmatpush1.bf16.msra.mxu0 0
    %2023 = vmatprep.subr.bf16.mxu0 0
    %2024 = vmatpush1.bf16.msra.mxu0 0
    %2025 = vmatprep.subr.bf16.mxu0 0
    %2026 = vmatpush1.bf16.msra.mxu0 0
    %2027 = vmatprep.subr.bf16.mxu0 0
    %2028 = vmatpush1.bf16.msra.mxu0 0
    %2029 = vmatprep.subr.bf16.mxu0 0
    %2030 = vmatpush1.bf16.msra.mxu0 0
    %2031 = vmatprep.subr.bf16.mxu0 0
    %2032 = vmatpush1.bf16.msra.mxu0 0
    %2033 = vmatprep.mubr.bf16.mxu0 0
    %2034 = vmatmul.mubr.bf16.gmra.mrb[0].mxu0 %v1990
    %v2035 = vpop.f32.mrb[0].mxu0
    %v2036 = vadd.f32 0.0, %v2035
    %v2037 = vpop.f32.mrb[0].mxu0
    %v2038 = vpop.f32.mrb[0].mxu0
    %v2039 = vadd.f32 0.0, %v2038
    %v2040 = vpop.f32.mrb[0].mxu0
    %2041 = vmatprep.mubr.bf16.mxu0 0
    %2042 = vmatmul.mubr.bf16.gmra.mrb[0].mxu0 %v1993
    %v2043 = vpop.f32.mrb[0].mxu0
    %v2044 = vadd.f32 0.0, %v2043
    %v2045 = vpop.f32.mrb[0].mxu0
    %v2046 = vpop.f32.mrb[0].mxu0
    %v2047 = vadd.f32 0.0, %v2046
    %v2048 = vpop.f32.mrb[0].mxu0
    %2049 = vmatprep.mubr.bf16.mxu0 0
    %2050 = vmatmul.mubr.bf16.gmra.mrb[0].mxu0 %v1996
    %v2051 = vpop.f32.mrb[0].mxu0
    %v2052 = vadd.f32 0.0, %v2051
    %v2053 = vpop.f32.mrb[0].mxu0
    %v2054 = vpop.f32.mrb[0].mxu0
    %v2055 = vadd.f32 0.0, %v2054
    %v2056 = vpop.f32.mrb[0].mxu0
    %2057 = vmatprep.mubr.bf16.mxu0 0
    %2058 = vmatmul.mubr.bf16.gmra.mrb[0].mxu0 %v1999
    %v2059 = vpop.f32.mrb[0].mxu0
    %v2060 = vadd.f32 0.0, %v2059
    %v2061 = vpop.f32.mrb[0].mxu0
    %v2062 = vpop.f32.mrb[0].mxu0
    %v2063 = vadd.f32 0.0, %v2062
    %v2064 = vpop.f32.mrb[0].mxu0
    %2065 = vdwg.mxu0
    %vm2066 = vcmp.gt.f32.partialorder %v2036, 0.0
    %vm2067 = vcmp.gt.f32.partialorder %v2039, 0.0
    %vm2068 = vcmp.gt.f32.partialorder %v2044, 0.0
    %vm2069 = vcmp.gt.f32.partialorder %v2047, 0.0
    %vm2070 = vcmp.gt.f32.partialorder %v2052, 0.0
    %vm2071 = vcmp.gt.f32.partialorder %v2055, 0.0
    %vm2072 = vcmp.gt.f32.partialorder %v2060, 0.0
    %vm2073 = vcmp.gt.f32.partialorder %v2063, 0.0
    %v2074 = vrcp.pop %v2036
    %v2075 = vrcp.pop %v2039
    %v2076 = vrcp.pop %v2044
    %v2077 = vrcp.pop %v2047
    %v2078 = vrcp.pop %v2052
    %v2079 = vrcp.pop %v2055
    %v2080 = vrcp.pop %v2060
    %v2081 = vrcp.pop %v2063
    %v2082 = vsel %vm2066, %v2074, 0.0
    %v2083 = vsel %vm2067, %v2075, 0.0
    %v2084 = vsel %vm2068, %v2076, 0.0
    %v2085 = vsel %vm2069, %v2077, 0.0
    %v2086 = vsel %vm2070, %v2078, 0.0
    %v2087 = vsel %vm2071, %v2079, 0.0
    %v2088 = vsel %vm2072, %v2080, 0.0
    %v2089 = vsel %vm2073, %v2081, 0.0
    %2091 = vset.pattern.permute.xlu0 32
    %2092 = vperm.xlu0 %2091, %v2082
    %v2093 = vpop.permute.xlu0 %2092
    %2096 = vset.pattern.permute.xlu0 32
    %2097 = vperm.xlu0 %2096, %v2083
    %v2098 = vpop.permute.xlu0 %2097
    %2101 = vset.pattern.permute.xlu0 32
    %2102 = vperm.xlu0 %2101, %v2084
    %v2103 = vpop.permute.xlu0 %2102
    %2106 = vset.pattern.permute.xlu0 32
    %2107 = vperm.xlu0 %2106, %v2085
    %v2108 = vpop.permute.xlu0 %2107
    %2111 = vset.pattern.permute.xlu0 32
    %2112 = vperm.xlu0 %2111, %v2086
    %v2113 = vpop.permute.xlu0 %2112
    %2116 = vset.pattern.permute.xlu0 32
    %2117 = vperm.xlu0 %2116, %v2087
    %v2118 = vpop.permute.xlu0 %2117
    %2121 = vset.pattern.permute.xlu0 32
    %2122 = vperm.xlu0 %2121, %v2088
    %v2123 = vpop.permute.xlu0 %2122
    %2126 = vset.pattern.permute.xlu0 32
    %2127 = vperm.xlu0 %2126, %v2089
    %v2128 = vpop.permute.xlu0 %2127
    %v2130 = vmul.f32 %v2093, %v2036
    %v2131 = vmul.f32 %v2098, %v2039
    %v2132 = vmul.f32 %v2103, %v2044
    %v2133 = vmul.f32 %v2108, %v2047
    %v2134 = vmul.f32 %v2113, %v2052
    %v2135 = vmul.f32 %v2118, %v2055
    %v2136 = vmul.f32 %v2123, %v2060
    %v2137 = vmul.f32 %v2128, %v2063
    %v2138 = vpack.c.bf16 %v2131, %v2130
    %v2139 = vpack.c.bf16 %v2133, %v2132
    %v2140 = vpack.c.bf16 %v2135, %v2134
    %v2141 = vpack.c.bf16 %v2137, %v2136
    %2142 = vmatprep.subr.bf16.mxu0 0
    %2143 = vmatpush1.bf16.msra.mxu0 %v2138
    %2144 = vmatprep.subr.bf16.mxu0 0
    %2145 = vmatpush1.bf16.msra.mxu0 %v2139
    %2146 = vmatprep.subr.bf16.mxu0 0
    %2147 = vmatpush1.bf16.msra.mxu0 %v2140
    %2148 = vmatprep.subr.bf16.mxu0 0
    %2149 = vmatpush1.bf16.msra.mxu0 %v2141
    %2150 = vmatprep.subr.bf16.mxu0 0
    %2151 = vmatpush1.bf16.msra.mxu0 0
    %2152 = vmatprep.subr.bf16.mxu0 0
    %2153 = vmatpush1.bf16.msra.mxu0 0
    %2154 = vmatprep.subr.bf16.mxu0 0
    %2155 = vmatpush1.bf16.msra.mxu0 0
    %2156 = vmatprep.subr.bf16.mxu0 0
    %2157 = vmatpush1.bf16.msra.mxu0 0
    %2158 = vmatprep.subr.bf16.mxu0 0
    %2159 = vmatpush1.bf16.msra.mxu0 0
    %2160 = vmatprep.subr.bf16.mxu0 0
    %2161 = vmatpush1.bf16.msra.mxu0 0
    %2162 = vmatprep.subr.bf16.mxu0 0
    %2163 = vmatpush1.bf16.msra.mxu0 0
    %2164 = vmatprep.subr.bf16.mxu0 0
    %2165 = vmatpush1.bf16.msra.mxu0 0
    %2166 = vmatprep.subr.bf16.mxu0 0
    %2167 = vmatpush1.bf16.msra.mxu0 0
    %2168 = vmatprep.subr.bf16.mxu0 0
    %2169 = vmatpush1.bf16.msra.mxu0 0
    %2170 = vmatprep.subr.bf16.mxu0 0
    %2171 = vmatpush1.bf16.msra.mxu0 0
    %2172 = vmatprep.subr.bf16.mxu0 0
    %2173 = vmatpush1.bf16.msra.mxu0 0
    %2174 = vmatprep.mubr.bf16.mxu0 0
    %2175 = vmatmul.mubr.bf16.gmra.mrb[0].mxu0 %v1990
    %v2176 = vpop.f32.mrb[0].mxu0
    %v2177 = vadd.f32 0.0, %v2176
    %v2178 = vpop.f32.mrb[0].mxu0
    %v2179 = vpop.f32.mrb[0].mxu0
    %v2180 = vadd.f32 0.0, %v2179
    %v2181 = vpop.f32.mrb[0].mxu0
    %2182 = vmatprep.mubr.bf16.mxu0 0
    %2183 = vmatmul.mubr.bf16.gmra.mrb[0].mxu0 %v1993
    %v2184 = vpop.f32.mrb[0].mxu0
    %v2185 = vadd.f32 0.0, %v2184
    %v2186 = vpop.f32.mrb[0].mxu0
    %v2187 = vpop.f32.mrb[0].mxu0
    %v2188 = vadd.f32 0.0, %v2187
    %v2189 = vpop.f32.mrb[0].mxu0
    %2190 = vmatprep.mubr.bf16.mxu0 0
    %2191 = vmatmul.mubr.bf16.gmra.mrb[0].mxu0 %v1996
    %v2192 = vpop.f32.mrb[0].mxu0
    %v2193 = vadd.f32 0.0, %v2192
    %v2194 = vpop.f32.mrb[0].mxu0
    %v2195 = vpop.f32.mrb[0].mxu0
    %v2196 = vadd.f32 0.0, %v2195
    %v2197 = vpop.f32.mrb[0].mxu0
    %2198 = vmatprep.mubr.bf16.mxu0 0
    %2199 = vmatmul.mubr.bf16.gmra.mrb[0].mxu0 %v1999
    %v2200 = vpop.f32.mrb[0].mxu0
    %v2201 = vadd.f32 0.0, %v2200
    %v2202 = vpop.f32.mrb[0].mxu0
    %v2203 = vpop.f32.mrb[0].mxu0
    %v2204 = vadd.f32 0.0, %v2203
    %v2205 = vpop.f32.mrb[0].mxu0
    %2206 = vdwg.mxu0
    %v2207 = vmul.f32 %v2093, %v2177
    %v2208 = vmul.f32 %v2098, %v2180
    %v2209 = vmul.f32 %v2103, %v2185
    %v2210 = vmul.f32 %v2108, %v2188
    %v2211 = vmul.f32 %v2113, %v2193
    %v2212 = vmul.f32 %v2118, %v2196
    %v2213 = vmul.f32 %v2123, %v2201
    %v2214 = vmul.f32 %v2128, %v2204
    %v2215 = vmul.f32 %v1945, 2.5
    %v2216 = vmul.f32 %v1946, 2.5
    %v2217 = vmul.f32 %v1947, 2.5
    %v2218 = vmul.f32 %v1948, 2.5
    %v2219 = vmul.f32 %v1949, 2.5
    %v2220 = vmul.f32 %v1950, 2.5
    %v2221 = vmul.f32 %v1951, 2.5
    %v2222 = vmul.f32 %v1952, 2.5
    %v2223 = vmul.f32 %v2130, 2.0
    %v2224 = vmul.f32 %v2131, 2.0
    %v2225 = vmul.f32 %v2132, 2.0
    %v2226 = vmul.f32 %v2133, 2.0
    %v2227 = vmul.f32 %v2134, 2.0
    %v2228 = vmul.f32 %v2135, 2.0
    %v2229 = vmul.f32 %v2136, 2.0
    %v2230 = vmul.f32 %v2137, 2.0
    %v2231 = vadd.f32 %v2215, %v2223
    %v2232 = vadd.f32 %v2216, %v2224
    %v2233 = vadd.f32 %v2217, %v2225
    %v2234 = vadd.f32 %v2218, %v2226
    %v2235 = vadd.f32 %v2219, %v2227
    %v2236 = vadd.f32 %v2220, %v2228
    %v2237 = vadd.f32 %v2221, %v2229
    %v2238 = vadd.f32 %v2222, %v2230
    %v2239 = vmul.f32 %v2207, 0.5
    %v2240 = vmul.f32 %v2208, 0.5
    %v2241 = vmul.f32 %v2209, 0.5
    %v2242 = vmul.f32 %v2210, 0.5
    %v2243 = vmul.f32 %v2211, 0.5
    %v2244 = vmul.f32 %v2212, 0.5
    %v2245 = vmul.f32 %v2213, 0.5
    %v2246 = vmul.f32 %v2214, 0.5
    %v2247 = vadd.f32 %v2231, %v2239
    %v2248 = vadd.f32 %v2232, %v2240
    %v2249 = vadd.f32 %v2233, %v2241
    %v2250 = vadd.f32 %v2234, %v2242
    %v2251 = vadd.f32 %v2235, %v2243
    %v2252 = vadd.f32 %v2236, %v2244
    %v2253 = vadd.f32 %v2237, %v2245
    %v2254 = vadd.f32 %v2238, %v2246
    %s2255 = scalar_lea.vmem %s0, 224
    %v2256 = vld [vmem:[%s2255] sm:$0xf]
    %v2257 = vld [vmem:[%s2255 + $0x4] sm:$0xf]
    %v2258 = vld [vmem:[%s2255 + $0x8] sm:$0xf]
    %v2259 = vld [vmem:[%s2255 + $0xc] sm:$0xf]
    %v2260 = vld [vmem:[%s2255 + $0x10] sm:$0xf]
    %v2261 = vld [vmem:[%s2255 + $0x14] sm:$0xf]
    %v2262 = vld [vmem:[%s2255 + $0x18] sm:$0xf]
    %v2263 = vld [vmem:[%s2255 + $0x1c] sm:$0xf]
    %s2264 = scalar_lea.vmem %s1, 448
    %v2265 = vld [vmem:[%s2264] sm:$0xff]
    %v2266 = vld [vmem:[%s2264 + $0x8] sm:$0xff]
    %v2267 = vld [vmem:[%s2264 + $0x10] sm:$0xff]
    %v2268 = vld [vmem:[%s2264 + $0x18] sm:$0xff]
    %v2269 = vld [vmem:[%s2264 + $0x20] sm:$0xff]
    %v2270 = vld [vmem:[%s2264 + $0x28] sm:$0xff]
    %v2271 = vld [vmem:[%s2264 + $0x30] sm:$0xff]
    %v2272 = vld [vmem:[%s2264 + $0x38] sm:$0xff]
    %v2273 = vpack.c.bf16 %v2266, %v2265
    %v2274 = vpack.c.bf16 %v2268, %v2267
    %v2275 = vpack.c.bf16 %v2270, %v2269
    %v2276 = vpack.c.bf16 %v2272, %v2271
    %v2278 = vsel %vm34, %v2273, 1065369472
    %v2281 = vsel %vm34, %v2274, 1065369472
    %v2284 = vsel %vm34, %v2275, 1065369472
    %v2287 = vsel %vm34, %v2276, 1065369472
    %v2297 = vunpack.c.l.b16 %v2256
    %v2298 = vunpack.c.l.b16 %v2257
    %v2299 = vunpack.c.l.b16 %v2258
    %v2300 = vunpack.c.l.b16 %v2259
    %v2301 = vunpack.c.l.b16 %v2260
    %v2302 = vunpack.c.l.b16 %v2261
    %v2303 = vunpack.c.l.b16 %v2262
    %v2304 = vunpack.c.l.b16 %v2263
    %v2305 = vpack.c.b16 %v2298, %v2297
    %v2306 = vpack.c.b16 %v2300, %v2299
    %v2307 = vpack.c.b16 %v2302, %v2301
    %v2308 = vpack.c.b16 %v2304, %v2303
    %v2310 = vsel %vm68, %v2305, 0
    %v2313 = vsel %vm68, %v2306, 0
    %v2316 = vsel %vm68, %v2307, 0
    %v2319 = vsel %vm68, %v2308, 0
    %2321 = vmatprep.subr.bf16.mxu0 0
    %2322 = vmatpush1.bf16.msra.mxu0 %v2278
    %2323 = vmatprep.subr.bf16.mxu0 0
    %2324 = vmatpush1.bf16.msra.mxu0 %v2281
    %2325 = vmatprep.subr.bf16.mxu0 0
    %2326 = vmatpush1.bf16.msra.mxu0 %v2284
    %2327 = vmatprep.subr.bf16.mxu0 0
    %2328 = vmatpush1.bf16.msra.mxu0 %v2287
    %2329 = vmatprep.subr.bf16.mxu0 0
    %2330 = vmatpush1.bf16.msra.mxu0 0
    %2331 = vmatprep.subr.bf16.mxu0 0
    %2332 = vmatpush1.bf16.msra.mxu0 0
    %2333 = vmatprep.subr.bf16.mxu0 0
    %2334 = vmatpush1.bf16.msra.mxu0 0
    %2335 = vmatprep.subr.bf16.mxu0 0
    %2336 = vmatpush1.bf16.msra.mxu0 0
    %2337 = vmatprep.subr.bf16.mxu0 0
    %2338 = vmatpush1.bf16.msra.mxu0 0
    %2339 = vmatprep.subr.bf16.mxu0 0
    %2340 = vmatpush1.bf16.msra.mxu0 0
    %2341 = vmatprep.subr.bf16.mxu0 0
    %2342 = vmatpush1.bf16.msra.mxu0 0
    %2343 = vmatprep.subr.bf16.mxu0 0
    %2344 = vmatpush1.bf16.msra.mxu0 0
    %2345 = vmatprep.subr.bf16.mxu0 0
    %2346 = vmatpush1.bf16.msra.mxu0 0
    %2347 = vmatprep.subr.bf16.mxu0 0
    %2348 = vmatpush1.bf16.msra.mxu0 0
    %2349 = vmatprep.subr.bf16.mxu0 0
    %2350 = vmatpush1.bf16.msra.mxu0 0
    %2351 = vmatprep.subr.bf16.mxu0 0
    %2352 = vmatpush1.bf16.msra.mxu0 0
    %2353 = vmatprep.mubr.bf16.mxu0 0
    %2354 = vmatmul.mubr.bf16.gmra.mrb[0].mxu0 %v2310
    %v2355 = vpop.f32.mrb[0].mxu0
    %v2356 = vadd.f32 0.0, %v2355
    %v2357 = vpop.f32.mrb[0].mxu0
    %v2358 = vpop.f32.mrb[0].mxu0
    %v2359 = vadd.f32 0.0, %v2358
    %v2360 = vpop.f32.mrb[0].mxu0
    %2361 = vmatprep.mubr.bf16.mxu0 0
    %2362 = vmatmul.mubr.bf16.gmra.mrb[0].mxu0 %v2313
    %v2363 = vpop.f32.mrb[0].mxu0
    %v2364 = vadd.f32 0.0, %v2363
    %v2365 = vpop.f32.mrb[0].mxu0
    %v2366 = vpop.f32.mrb[0].mxu0
    %v2367 = vadd.f32 0.0, %v2366
    %v2368 = vpop.f32.mrb[0].mxu0
    %2369 = vmatprep.mubr.bf16.mxu0 0
    %2370 = vmatmul.mubr.bf16.gmra.mrb[0].mxu0 %v2316
    %v2371 = vpop.f32.mrb[0].mxu0
    %v2372 = vadd.f32 0.0, %v2371
    %v2373 = vpop.f32.mrb[0].mxu0
    %v2374 = vpop.f32.mrb[0].mxu0
    %v2375 = vadd.f32 0.0, %v2374
    %v2376 = vpop.f32.mrb[0].mxu0
    %2377 = vmatprep.mubr.bf16.mxu0 0
    %2378 = vmatmul.mubr.bf16.gmra.mrb[0].mxu0 %v2319
    %v2379 = vpop.f32.mrb[0].mxu0
    %v2380 = vadd.f32 0.0, %v2379
    %v2381 = vpop.f32.mrb[0].mxu0
    %v2382 = vpop.f32.mrb[0].mxu0
    %v2383 = vadd.f32 0.0, %v2382
    %v2384 = vpop.f32.mrb[0].mxu0
    %2385 = vdwg.mxu0
    %vm2386 = vcmp.gt.f32.partialorder %v2356, 0.0
    %vm2387 = vcmp.gt.f32.partialorder %v2359, 0.0
    %vm2388 = vcmp.gt.f32.partialorder %v2364, 0.0
    %vm2389 = vcmp.gt.f32.partialorder %v2367, 0.0
    %vm2390 = vcmp.gt.f32.partialorder %v2372, 0.0
    %vm2391 = vcmp.gt.f32.partialorder %v2375, 0.0
    %vm2392 = vcmp.gt.f32.partialorder %v2380, 0.0
    %vm2393 = vcmp.gt.f32.partialorder %v2383, 0.0
    %v2394 = vrcp.pop %v2356
    %v2395 = vrcp.pop %v2359
    %v2396 = vrcp.pop %v2364
    %v2397 = vrcp.pop %v2367
    %v2398 = vrcp.pop %v2372
    %v2399 = vrcp.pop %v2375
    %v2400 = vrcp.pop %v2380
    %v2401 = vrcp.pop %v2383
    %v2402 = vsel %vm2386, %v2394, 0.0
    %v2403 = vsel %vm2387, %v2395, 0.0
    %v2404 = vsel %vm2388, %v2396, 0.0
    %v2405 = vsel %vm2389, %v2397, 0.0
    %v2406 = vsel %vm2390, %v2398, 0.0
    %v2407 = vsel %vm2391, %v2399, 0.0
    %v2408 = vsel %vm2392, %v2400, 0.0
    %v2409 = vsel %vm2393, %v2401, 0.0
    %2411 = vset.pattern.permute.xlu0 32
    %2412 = vperm.xlu0 %2411, %v2402
    %v2413 = vpop.permute.xlu0 %2412
    %2416 = vset.pattern.permute.xlu0 32
    %2417 = vperm.xlu0 %2416, %v2403
    %v2418 = vpop.permute.xlu0 %2417
    %2421 = vset.pattern.permute.xlu0 32
    %2422 = vperm.xlu0 %2421, %v2404
    %v2423 = vpop.permute.xlu0 %2422
    %2426 = vset.pattern.permute.xlu0 32
    %2427 = vperm.xlu0 %2426, %v2405
    %v2428 = vpop.permute.xlu0 %2427
    %2431 = vset.pattern.permute.xlu0 32
    %2432 = vperm.xlu0 %2431, %v2406
    %v2433 = vpop.permute.xlu0 %2432
    %2436 = vset.pattern.permute.xlu0 32
    %2437 = vperm.xlu0 %2436, %v2407
    %v2438 = vpop.permute.xlu0 %2437
    %2441 = vset.pattern.permute.xlu0 32
    %2442 = vperm.xlu0 %2441, %v2408
    %v2443 = vpop.permute.xlu0 %2442
    %2446 = vset.pattern.permute.xlu0 32
    %2447 = vperm.xlu0 %2446, %v2409
    %v2448 = vpop.permute.xlu0 %2447
    %v2450 = vmul.f32 %v2413, %v2356
    %v2451 = vmul.f32 %v2418, %v2359
    %v2452 = vmul.f32 %v2423, %v2364
    %v2453 = vmul.f32 %v2428, %v2367
    %v2454 = vmul.f32 %v2433, %v2372
    %v2455 = vmul.f32 %v2438, %v2375
    %v2456 = vmul.f32 %v2443, %v2380
    %v2457 = vmul.f32 %v2448, %v2383
    %v2458 = vpack.c.bf16 %v2451, %v2450
    %v2459 = vpack.c.bf16 %v2453, %v2452
    %v2460 = vpack.c.bf16 %v2455, %v2454
    %v2461 = vpack.c.bf16 %v2457, %v2456
    %2462 = vmatprep.subr.bf16.mxu0 0
    %2463 = vmatpush1.bf16.msra.mxu0 %v2458
    %2464 = vmatprep.subr.bf16.mxu0 0
    %2465 = vmatpush1.bf16.msra.mxu0 %v2459
    %2466 = vmatprep.subr.bf16.mxu0 0
    %2467 = vmatpush1.bf16.msra.mxu0 %v2460
    %2468 = vmatprep.subr.bf16.mxu0 0
    %2469 = vmatpush1.bf16.msra.mxu0 %v2461
    %2470 = vmatprep.subr.bf16.mxu0 0
    %2471 = vmatpush1.bf16.msra.mxu0 0
    %2472 = vmatprep.subr.bf16.mxu0 0
    %2473 = vmatpush1.bf16.msra.mxu0 0
    %2474 = vmatprep.subr.bf16.mxu0 0
    %2475 = vmatpush1.bf16.msra.mxu0 0
    %2476 = vmatprep.subr.bf16.mxu0 0
    %2477 = vmatpush1.bf16.msra.mxu0 0
    %2478 = vmatprep.subr.bf16.mxu0 0
    %2479 = vmatpush1.bf16.msra.mxu0 0
    %2480 = vmatprep.subr.bf16.mxu0 0
    %2481 = vmatpush1.bf16.msra.mxu0 0
    %2482 = vmatprep.subr.bf16.mxu0 0
    %2483 = vmatpush1.bf16.msra.mxu0 0
    %2484 = vmatprep.subr.bf16.mxu0 0
    %2485 = vmatpush1.bf16.msra.mxu0 0
    %2486 = vmatprep.subr.bf16.mxu0 0
    %2487 = vmatpush1.bf16.msra.mxu0 0
    %2488 = vmatprep.subr.bf16.mxu0 0
    %2489 = vmatpush1.bf16.msra.mxu0 0
    %2490 = vmatprep.subr.bf16.mxu0 0
    %2491 = vmatpush1.bf16.msra.mxu0 0
    %2492 = vmatprep.subr.bf16.mxu0 0
    %2493 = vmatpush1.bf16.msra.mxu0 0
    %2494 = vmatprep.mubr.bf16.mxu0 0
    %2495 = vmatmul.mubr.bf16.gmra.mrb[0].mxu0 %v2310
    %v2496 = vpop.f32.mrb[0].mxu0
    %v2497 = vadd.f32 0.0, %v2496
    %v2498 = vpop.f32.mrb[0].mxu0
    %v2499 = vpop.f32.mrb[0].mxu0
    %v2500 = vadd.f32 0.0, %v2499
    %v2501 = vpop.f32.mrb[0].mxu0
    %2502 = vmatprep.mubr.bf16.mxu0 0
    %2503 = vmatmul.mubr.bf16.gmra.mrb[0].mxu0 %v2313
    %v2504 = vpop.f32.mrb[0].mxu0
    %v2505 = vadd.f32 0.0, %v2504
    %v2506 = vpop.f32.mrb[0].mxu0
    %v2507 = vpop.f32.mrb[0].mxu0
    %v2508 = vadd.f32 0.0, %v2507
    %v2509 = vpop.f32.mrb[0].mxu0
    %2510 = vmatprep.mubr.bf16.mxu0 0
    %2511 = vmatmul.mubr.bf16.gmra.mrb[0].mxu0 %v2316
    %v2512 = vpop.f32.mrb[0].mxu0
    %v2513 = vadd.f32 0.0, %v2512
    %v2514 = vpop.f32.mrb[0].mxu0
    %v2515 = vpop.f32.mrb[0].mxu0
    %v2516 = vadd.f32 0.0, %v2515
    %v2517 = vpop.f32.mrb[0].mxu0
    %2518 = vmatprep.mubr.bf16.mxu0 0
    %2519 = vmatmul.mubr.bf16.gmra.mrb[0].mxu0 %v2319
    %v2520 = vpop.f32.mrb[0].mxu0
    %v2521 = vadd.f32 0.0, %v2520
    %v2522 = vpop.f32.mrb[0].mxu0
    %v2523 = vpop.f32.mrb[0].mxu0
    %v2524 = vadd.f32 0.0, %v2523
    %v2525 = vpop.f32.mrb[0].mxu0
    %2526 = vdwg.mxu0
    %v2527 = vmul.f32 %v2413, %v2497
    %v2528 = vmul.f32 %v2418, %v2500
    %v2529 = vmul.f32 %v2423, %v2505
    %v2530 = vmul.f32 %v2428, %v2508
    %v2531 = vmul.f32 %v2433, %v2513
    %v2532 = vmul.f32 %v2438, %v2516
    %v2533 = vmul.f32 %v2443, %v2521
    %v2534 = vmul.f32 %v2448, %v2524
    %v2535 = vmul.f32 %v2265, 2.5
    %v2536 = vmul.f32 %v2266, 2.5
    %v2537 = vmul.f32 %v2267, 2.5
    %v2538 = vmul.f32 %v2268, 2.5
    %v2539 = vmul.f32 %v2269, 2.5
    %v2540 = vmul.f32 %v2270, 2.5
    %v2541 = vmul.f32 %v2271, 2.5
    %v2542 = vmul.f32 %v2272, 2.5
    %v2543 = vmul.f32 %v2450, 2.0
    %v2544 = vmul.f32 %v2451, 2.0
    %v2545 = vmul.f32 %v2452, 2.0
    %v2546 = vmul.f32 %v2453, 2.0
    %v2547 = vmul.f32 %v2454, 2.0
    %v2548 = vmul.f32 %v2455, 2.0
    %v2549 = vmul.f32 %v2456, 2.0
    %v2550 = vmul.f32 %v2457, 2.0
    %v2551 = vadd.f32 %v2535, %v2543
    %v2552 = vadd.f32 %v2536, %v2544
    %v2553 = vadd.f32 %v2537, %v2545
    %v2554 = vadd.f32 %v2538, %v2546
    %v2555 = vadd.f32 %v2539, %v2547
    %v2556 = vadd.f32 %v2540, %v2548
    %v2557 = vadd.f32 %v2541, %v2549
    %v2558 = vadd.f32 %v2542, %v2550
    %v2559 = vmul.f32 %v2527, 0.5
    %v2560 = vmul.f32 %v2528, 0.5
    %v2561 = vmul.f32 %v2529, 0.5
    %v2562 = vmul.f32 %v2530, 0.5
    %v2563 = vmul.f32 %v2531, 0.5
    %v2564 = vmul.f32 %v2532, 0.5
    %v2565 = vmul.f32 %v2533, 0.5
    %v2566 = vmul.f32 %v2534, 0.5
    %v2567 = vadd.f32 %v2551, %v2559
    %v2568 = vadd.f32 %v2552, %v2560
    %v2569 = vadd.f32 %v2553, %v2561
    %v2570 = vadd.f32 %v2554, %v2562
    %v2571 = vadd.f32 %v2555, %v2563
    %v2572 = vadd.f32 %v2556, %v2564
    %v2573 = vadd.f32 %v2557, %v2565
    %v2574 = vadd.f32 %v2558, %v2566
    %2583 = vrot.lane.b32.xlu0 %v647, 32
    %v2584 = vpop.permute.xlu0 %2583
    %2585 = vrot.lane.b32.xlu0 %v648, 32
    %v2586 = vpop.permute.xlu0 %2585
    %2587 = vrot.lane.b32.xlu0 %v649, 32
    %v2588 = vpop.permute.xlu0 %2587
    %2589 = vrot.lane.b32.xlu0 %v650, 32
    %v2590 = vpop.permute.xlu0 %2589
    %2591 = vrot.lane.b32.xlu0 %v651, 32
    %v2592 = vpop.permute.xlu0 %2591
    %2593 = vrot.lane.b32.xlu0 %v652, 32
    %v2594 = vpop.permute.xlu0 %2593
    %2595 = vrot.lane.b32.xlu0 %v653, 32
    %v2596 = vpop.permute.xlu0 %2595
    %2597 = vrot.lane.b32.xlu0 %v654, 32
    %v2598 = vpop.permute.xlu0 %2597
    %2615 = vrot.lane.b32.xlu0 %v967, 64
    %v2616 = vpop.permute.xlu0 %2615
    %2617 = vrot.lane.b32.xlu0 %v968, 64
    %v2618 = vpop.permute.xlu0 %2617
    %2619 = vrot.lane.b32.xlu0 %v969, 64
    %v2620 = vpop.permute.xlu0 %2619
    %2621 = vrot.lane.b32.xlu0 %v970, 64
    %v2622 = vpop.permute.xlu0 %2621
    %2623 = vrot.lane.b32.xlu0 %v971, 64
    %v2624 = vpop.permute.xlu0 %2623
    %2625 = vrot.lane.b32.xlu0 %v972, 64
    %v2626 = vpop.permute.xlu0 %2625
    %2627 = vrot.lane.b32.xlu0 %v973, 64
    %v2628 = vpop.permute.xlu0 %2627
    %2629 = vrot.lane.b32.xlu0 %v974, 64
    %v2630 = vpop.permute.xlu0 %2629
    %2647 = vrot.lane.b32.xlu0 %v1287, 96
    %v2648 = vpop.permute.xlu0 %2647
    %2649 = vrot.lane.b32.xlu0 %v1288, 96
    %v2650 = vpop.permute.xlu0 %2649
    %2651 = vrot.lane.b32.xlu0 %v1289, 96
    %v2652 = vpop.permute.xlu0 %2651
    %2653 = vrot.lane.b32.xlu0 %v1290, 96
    %v2654 = vpop.permute.xlu0 %2653
    %2655 = vrot.lane.b32.xlu0 %v1291, 96
    %v2656 = vpop.permute.xlu0 %2655
    %2657 = vrot.lane.b32.xlu0 %v1292, 96
    %v2658 = vpop.permute.xlu0 %2657
    %2659 = vrot.lane.b32.xlu0 %v1293, 96
    %v2660 = vpop.permute.xlu0 %2659
    %2661 = vrot.lane.b32.xlu0 %v1294, 96
    %v2662 = vpop.permute.xlu0 %2661
    %2679 = vrot.lane.b32.xlu0 %v1927, 32
    %v2680 = vpop.permute.xlu0 %2679
    %2681 = vrot.lane.b32.xlu0 %v1928, 32
    %v2682 = vpop.permute.xlu0 %2681
    %2683 = vrot.lane.b32.xlu0 %v1929, 32
    %v2684 = vpop.permute.xlu0 %2683
    %2685 = vrot.lane.b32.xlu0 %v1930, 32
    %v2686 = vpop.permute.xlu0 %2685
    %2687 = vrot.lane.b32.xlu0 %v1931, 32
    %v2688 = vpop.permute.xlu0 %2687
    %2689 = vrot.lane.b32.xlu0 %v1932, 32
    %v2690 = vpop.permute.xlu0 %2689
    %2691 = vrot.lane.b32.xlu0 %v1933, 32
    %v2692 = vpop.permute.xlu0 %2691
    %2693 = vrot.lane.b32.xlu0 %v1934, 32
    %v2694 = vpop.permute.xlu0 %2693
    %2711 = vrot.lane.b32.xlu0 %v2247, 64
    %v2712 = vpop.permute.xlu0 %2711
    %2713 = vrot.lane.b32.xlu0 %v2248, 64
    %v2714 = vpop.permute.xlu0 %2713
    %2715 = vrot.lane.b32.xlu0 %v2249, 64
    %v2716 = vpop.permute.xlu0 %2715
    %2717 = vrot.lane.b32.xlu0 %v2250, 64
    %v2718 = vpop.permute.xlu0 %2717
    %2719 = vrot.lane.b32.xlu0 %v2251, 64
    %v2720 = vpop.permute.xlu0 %2719
    %2721 = vrot.lane.b32.xlu0 %v2252, 64
    %v2722 = vpop.permute.xlu0 %2721
    %2723 = vrot.lane.b32.xlu0 %v2253, 64
    %v2724 = vpop.permute.xlu0 %2723
    %2725 = vrot.lane.b32.xlu0 %v2254, 64
    %v2726 = vpop.permute.xlu0 %2725
    %2743 = vrot.lane.b32.xlu0 %v2567, 96
    %v2744 = vpop.permute.xlu0 %2743
    %2745 = vrot.lane.b32.xlu0 %v2568, 96
    %v2746 = vpop.permute.xlu0 %2745
    %2747 = vrot.lane.b32.xlu0 %v2569, 96
    %v2748 = vpop.permute.xlu0 %2747
    %2749 = vrot.lane.b32.xlu0 %v2570, 96
    %v2750 = vpop.permute.xlu0 %2749
    %2751 = vrot.lane.b32.xlu0 %v2571, 96
    %v2752 = vpop.permute.xlu0 %2751
    %2753 = vrot.lane.b32.xlu0 %v2572, 96
    %v2754 = vpop.permute.xlu0 %2753
    %2755 = vrot.lane.b32.xlu0 %v2573, 96
    %v2756 = vpop.permute.xlu0 %2755
    %2757 = vrot.lane.b32.xlu0 %v2574, 96
    %v2758 = vpop.permute.xlu0 %2757
    %v2767 = vsel %vm34, %v327, %v2584
    %v2768 = vsel %vm34, %v328, %v2586
    %v2769 = vsel %vm34, %v329, %v2588
    %v2770 = vsel %vm34, %v330, %v2590
    %v2771 = vsel %vm34, %v331, %v2592
    %v2772 = vsel %vm34, %v332, %v2594
    %v2773 = vsel %vm34, %v333, %v2596
    %v2774 = vsel %vm34, %v334, %v2598
    %v2775 = vsel %vm68, %v2767, %v2616
    %v2776 = vsel %vm68, %v2768, %v2618
    %v2777 = vsel %vm68, %v2769, %v2620
    %v2778 = vsel %vm68, %v2770, %v2622
    %v2779 = vsel %vm68, %v2771, %v2624
    %v2780 = vsel %vm68, %v2772, %v2626
    %v2781 = vsel %vm68, %v2773, %v2628
    %v2782 = vsel %vm68, %v2774, %v2630
    %vm2783 = vcmask 785408
    %v2784 = vsel %vm2783, %v2775, %v2648
    %v2785 = vsel %vm2783, %v2776, %v2650
    %v2786 = vsel %vm2783, %v2777, %v2652
    %v2787 = vsel %vm2783, %v2778, %v2654
    %v2788 = vsel %vm2783, %v2779, %v2656
    %v2789 = vsel %vm2783, %v2780, %v2658
    %v2790 = vsel %vm2783, %v2781, %v2660
    %v2791 = vsel %vm2783, %v2782, %v2662
    %v2792 = vsel %vm34, %v1607, %v2680
    %v2793 = vsel %vm34, %v1608, %v2682
    %v2794 = vsel %vm34, %v1609, %v2684
    %v2795 = vsel %vm34, %v1610, %v2686
    %v2796 = vsel %vm34, %v1611, %v2688
    %v2797 = vsel %vm34, %v1612, %v2690
    %v2798 = vsel %vm34, %v1613, %v2692
    %v2799 = vsel %vm34, %v1614, %v2694
    %v2800 = vsel %vm68, %v2792, %v2712
    %v2801 = vsel %vm68, %v2793, %v2714
    %v2802 = vsel %vm68, %v2794, %v2716
    %v2803 = vsel %vm68, %v2795, %v2718
    %v2804 = vsel %vm68, %v2796, %v2720
    %v2805 = vsel %vm68, %v2797, %v2722
    %v2806 = vsel %vm68, %v2798, %v2724
    %v2807 = vsel %vm68, %v2799, %v2726
    %v2808 = vsel %vm2783, %v2800, %v2744
    %v2809 = vsel %vm2783, %v2801, %v2746
    %v2810 = vsel %vm2783, %v2802, %v2748
    %v2811 = vsel %vm2783, %v2803, %v2750
    %v2812 = vsel %vm2783, %v2804, %v2752
    %v2813 = vsel %vm2783, %v2805, %v2754
    %v2814 = vsel %vm2783, %v2806, %v2756
    %v2815 = vsel %vm2783, %v2807, %v2758
    %2816 = vst [vmem:[#allocation2] sm:$0xff] %v2784
    %2817 = vst [vmem:[#allocation2 + $0x8] sm:$0xff] %v2808
    %2818 = vst [vmem:[#allocation2 + $0x10] sm:$0xff] %v2785
    %2819 = vst [vmem:[#allocation2 + $0x18] sm:$0xff] %v2809
    %2820 = vst [vmem:[#allocation2 + $0x20] sm:$0xff] %v2786
    %2821 = vst [vmem:[#allocation2 + $0x28] sm:$0xff] %v2810
    %2822 = vst [vmem:[#allocation2 + $0x30] sm:$0xff] %v2787
    %2823 = vst [vmem:[#allocation2 + $0x38] sm:$0xff] %v2811
    %2824 = vst [vmem:[#allocation2 + $0x40] sm:$0xff] %v2788
    %2825 = vst [vmem:[#allocation2 + $0x48] sm:$0xff] %v2812
    %2826 = vst [vmem:[#allocation2 + $0x50] sm:$0xff] %v2789
    %2827 = vst [vmem:[#allocation2 + $0x58] sm:$0xff] %v2813
    %2828 = vst [vmem:[#allocation2 + $0x60] sm:$0xff] %v2790
    %2829 = vst [vmem:[#allocation2 + $0x68] sm:$0xff] %v2814
    %2830 = vst [vmem:[#allocation2 + $0x70] sm:$0xff] %v2791
    %2831 = vst [vmem:[#allocation2 + $0x78] sm:$0xff] %v2815
    // Predicated region
    $region10: #{tpu_custom_call.1} parent=1 // pred_check
      _
    $region11: #{tpu_custom_call.1} parent=1 // pred_check_branch
      %2833 = sbr.rel (0) target = $region13
    $region12: #{tpu_custom_call.1} parent=1 // pred_region
      %s2835 = ssub.s32 2048, 2048
      %2836 = vsyncadd [#allocation3], %s2835
      %s2837 = sshll.u32 [#allocation2], 4
      %s2838 = int_to_ptr.vmem [resolvable:$true] %s2837
      %2843 = dma.vmem_to_hbm [thread:$0]  %s2838, 2048, %s2, [#allocation3], 256, 256, 16
    $region13: #{tpu_custom_call.1} parent=1 // pred_fallthru
      _
    // Predicated region
    $region14: #{tpu_custom_call.1} parent=1 // pred_check
      _
    $region15: #{tpu_custom_call.1} parent=1 // pred_check_branch
      %2845 = sbr.rel (0) target = $region17
    $region16: #{tpu_custom_call.1} parent=1 // pred_region
      %2846 = dma.done [#allocation3], 2048
    $region17: #{tpu_custom_call.1} parent=1 // pred_fallthru
      _
    %2847 = vsyncpa [#allocation3], 1

</llo_original>
